<compile_context>
chip_gen: v7x
topology: tpu7x:2x2x1
jax: 0.10.0
libtpu: 0.0.40
codegen_flags: <defaults>
</compile_context>

<pallas_src>
import jax
import jax.numpy as jnp
from jax.experimental import pallas as pl
from jax.experimental.pallas import tpu as pltpu


def _netvlad_kernel(x_ref, w_ref, cent_ref, res_ref, sa_ref):
    # x_ref:    (1, C, TP)      current batch element / spatial tile
    # w_ref:    (KG, C)         1x1 conv weight (resident across grid steps)
    # cent_ref: (K, C, 1)       real-cluster centroids (resident)
    # res_ref:  (1, K, C, TP)   weighted residual output
    # sa_ref:   (1, KG, TP)     soft-assignment output
    x = x_ref[0, :, :].astype(jnp.float32)                       # (C, TP)

    # Descriptor-wise L2 normalization over channels (F.normalize, eps=1e-12).
    sq = jnp.sum(x * x, axis=0, keepdims=True)                   # (1, TP)
    inv = jax.lax.rsqrt(jnp.maximum(sq, 1e-24))                  # == 1 / max(||x||, 1e-12)
    xn = x * inv                                                 # (C, TP)

    # 1x1 conv over channels == single MXU matmul (bias-free, vladv2=False).
    w = w_ref[...].astype(jnp.float32)                           # (KG, C)
    logits = jnp.dot(w, xn,
                     preferred_element_type=jnp.float32,
                     precision=jax.lax.Precision.HIGHEST)        # (KG, TP)

    # Softmax over clusters (sublane axis).
    m = jnp.max(logits, axis=0, keepdims=True)                   # (1, TP)
    e = jnp.exp(logits - m)                                      # (KG, TP)
    denom = jnp.sum(e, axis=0, keepdims=True)                    # (1, TP)
    sa = e * pl.reciprocal(denom, approx=False)                  # (KG, TP)
    sa_ref[0, :, :] = sa.astype(sa_ref.dtype)

    # Weighted residuals for the real (non-ghost) clusters.
    cent = cent_ref[...].astype(jnp.float32)                     # (K, C, 1)
    num_clusters = cent.shape[0]
    for j in range(num_clusters):                                # small static unroll
        c_j = cent[j]                                            # (C, 1)  lane-broadcast
        s_j = sa[j:j + 1, :]                                     # (1, TP) sublane-broadcast
        res_ref[0, j, :, :] = ((xn - c_j) * s_j).astype(res_ref.dtype)


def _choose_spatial_tile(P, K, C, itemsize, target_bytes=4 << 20):
    """Pick a lane tile TP: full P if it is not 128-divisible, else the largest
    128-multiple divisor of P keeping the (K, C, TP) output block <= target."""
    if P % 128 != 0:
        return P
    tp = 128
    while (tp * 2) <= P and P % (tp * 2) == 0 and K * C * (tp * 2) * itemsize <= target_bytes:
        tp *= 2
    return tp


def netvlad_forward(x, conv_weight, centroids, num_clusters):
    """x: (N, C, H, W); conv_weight: (K+G, C); centroids: (K+G, C).
    Returns (store_residual (N, K, C, H, W), soft_assign (N, K+G, H, W))."""
    N, C, H, W = x.shape
    KG = conv_weight.shape[0]
    K = num_clusters
    P = H * W

    x2 = x.reshape(N, C, P)                         # free: same row-major order
    cent3 = centroids[:K].reshape(K, C, 1)          # lane-broadcast friendly layout

    TP = _choose_spatial_tile(P, K, C, jnp.dtype(x.dtype).itemsize)
    grid = (N, P // TP)

    res, sa = pl.pallas_call(
        _netvlad_kernel,
        out_shape=(
            jax.ShapeDtypeStruct((N, K, C, P), x.dtype),
            jax.ShapeDtypeStruct((N, KG, P), x.dtype),
        ),
        grid_spec=pltpu.PrefetchScalarGridSpec(
            num_scalar_prefetch=0,
            grid=grid,
            in_specs=[
                pl.BlockSpec((1, C, TP), lambda n, p: (n, 0, p)),
                pl.BlockSpec((KG, C), lambda n, p: (0, 0)),
                pl.BlockSpec((K, C, 1), lambda n, p: (0, 0, 0)),
            ],
            out_specs=[
                pl.BlockSpec((1, K, C, TP), lambda n, p: (n, 0, 0, p)),
                pl.BlockSpec((1, KG, TP), lambda n, p: (n, 0, p)),
            ],
        ),
        compiler_params=pltpu.CompilerParams(
            dimension_semantics=("parallel", "parallel"),
        ),
    )(x2, conv_weight, cent3)

    # Pure layout glue back to the PyTorch output shapes.
    return res.reshape(N, K, C, H, W), sa.reshape(N, KG, H, W)


def reference_forward(x, conv_weight, centroids, num_clusters):
    """Pure-JAX reference mirroring the PyTorch module."""
    xf = x.astype(jnp.float32)
    norm = jnp.sqrt(jnp.sum(xf * xf, axis=1, keepdims=True))
    xn = xf / jnp.maximum(norm, 1e-12)
    logits = jnp.einsum("kc,nchw->nkhw", conv_weight.astype(jnp.float32), xn,
                        precision=jax.lax.Precision.HIGHEST)
    sa = jax.nn.softmax(logits, axis=1)
    cent = centroids[:num_clusters].astype(jnp.float32)
    res = (xn[:, None, :, :, :] - cent[None, :, :, None, None]) \
        * sa[:, :num_clusters, None, :, :]
    return res.astype(x.dtype), sa.astype(x.dtype)


if __name__ == "__main__":
    # Small shapes consistent with the module: N batch, C descriptor channels,
    # HxW spatial grid, K real clusters + G ghost clusters.
    N, C, H, W = 2, 128, 8, 8
    num_clusters, num_ghost = 8, 4
    KG = num_clusters + num_ghost

    key = jax.random.PRNGKey(0)
    kx, kw, kc = jax.random.split(key, 3)
    x = jax.random.normal(kx, (N, C, H, W), dtype=jnp.float32)
    conv_weight = 0.1 * jax.random.normal(kw, (KG, C), dtype=jnp.float32)   # 1x1 conv, no bias
    centroids = jax.random.uniform(kc, (KG, C), dtype=jnp.float32)          # torch.rand init

    res, sa = netvlad_forward(x, conv_weight, centroids, num_clusters)
    res, sa = jax.block_until_ready((res, sa))

    res_ref, sa_ref = reference_forward(x, conv_weight, centroids, num_clusters)
    assert res.shape == (N, num_clusters, C, H, W), res.shape
    assert sa.shape == (N, KG, H, W), sa.shape
    assert jnp.allclose(sa, sa_ref, atol=1e-5, rtol=1e-4), "soft_assign mismatch vs reference"
    assert jnp.allclose(res, res_ref, atol=1e-5, rtol=1e-4), "residual mismatch vs reference"

    print("KERNEL_OK")
</pallas_src>

<mosaic_0001>
module attributes {stable_mosaic.version = 11 : i64} {
  func.func @_netvlad_kernel(%arg0: i32, %arg1: i32, %arg2: memref<1x128x64xf32, #tpu.memory_space<vmem>>, %arg3: memref<12x128xf32, #tpu.memory_space<vmem>>, %arg4: memref<8x128x1xf32, #tpu.memory_space<vmem>>, %arg5: memref<1x8x128x64xf32, #tpu.memory_space<vmem>>, %arg6: memref<1x12x64xf32, #tpu.memory_space<vmem>>) attributes {dimension_semantics = [#tpu.dimension_semantics<parallel>, #tpu.dimension_semantics<parallel>], iteration_bounds = array<i64: 2, 1>, scalar_prefetch = 0 : i64, scratch_operands = 0 : i64, tpu.core_type = #tpu.core_type<tc>, window_params = [{transform_indices = @transform_0, window_bounds = array<i64: 1, 128, 64>}, {pipeline_mode = #tpu.pipeline_mode<synchronous>, transform_indices = @transform_1, window_bounds = array<i64: 12, 128>}, {pipeline_mode = #tpu.pipeline_mode<synchronous>, transform_indices = @transform_2, window_bounds = array<i64: 8, 128, 1>}, {transform_indices = @transform_3, window_bounds = array<i64: 1, 8, 128, 64>}, {transform_indices = @transform_4, window_bounds = array<i64: 1, 12, 64>}]} {
    %c0 = arith.constant 0 : index
    %c0_0 = arith.constant 0 : index
    %c0_1 = arith.constant 0 : index
    %0 = vector.load %arg2[%c0, %c0_0, %c0_1] : memref<1x128x64xf32, #tpu.memory_space<vmem>>, vector<1x128x64xf32>
    %1 = vector.shape_cast %0 : vector<1x128x64xf32> to vector<128x64xf32>
    %2 = arith.mulf %1, %1 : vector<128x64xf32>
    %cst = arith.constant dense<0.000000e+00> : vector<64xf32>
    %3 = vector.multi_reduction <add>, %2, %cst [0] : vector<128x64xf32> to vector<64xf32>
    %4 = vector.shape_cast %3 : vector<64xf32> to vector<1x64xf32>
    %cst_2 = arith.constant 1.000000e-24 : f32
    %5 = vector.broadcast %cst_2 : f32 to vector<1x64xf32>
    %6 = arith.maximumf %4, %5 : vector<1x64xf32>
    %7 = math.rsqrt %6 : vector<1x64xf32>
    %8 = vector.broadcast %7 : vector<1x64xf32> to vector<128x64xf32>
    %9 = arith.mulf %1, %8 : vector<128x64xf32>
    %c0_3 = arith.constant 0 : index
    %c0_4 = arith.constant 0 : index
    %10 = vector.load %arg3[%c0_3, %c0_4] : memref<12x128xf32, #tpu.memory_space<vmem>>, vector<12x128xf32>
    %cst_5 = arith.constant dense<0.000000e+00> : vector<12x64xf32>
    %11 = tpu.matmul %10, %9, %cst_5 {dimension_numbers = #tpu.dot_dimension_numbers<[1], [0], [0], [1], [0, 0, 1, 1], [], []>, precision = #tpu.contract_precision<fp32>} : vector<12x128xf32>, vector<128x64xf32>, vector<12x64xf32> -> vector<12x64xf32>
    %cst_6 = arith.constant dense<0xFF800000> : vector<64xf32>
    %12 = vector.multi_reduction <maximumf>, %11, %cst_6 [0] : vector<12x64xf32> to vector<64xf32>
    %13 = vector.shape_cast %12 : vector<64xf32> to vector<1x64xf32>
    %14 = vector.broadcast %13 : vector<1x64xf32> to vector<12x64xf32>
    %15 = arith.subf %11, %14 : vector<12x64xf32>
    %16 = math.exp %15 : vector<12x64xf32>
    %cst_7 = arith.constant dense<0.000000e+00> : vector<64xf32>
    %17 = vector.multi_reduction <add>, %16, %cst_7 [0] : vector<12x64xf32> to vector<64xf32>
    %18 = vector.shape_cast %17 : vector<64xf32> to vector<1x64xf32>
    %19 = tpu.reciprocal %18 : vector<1x64xf32> -> vector<1x64xf32>
    %20 = vector.broadcast %19 : vector<1x64xf32> to vector<12x64xf32>
    %21 = arith.mulf %16, %20 : vector<12x64xf32>
    %c0_8 = arith.constant 0 : index
    %c0_9 = arith.constant 0 : index
    %c0_10 = arith.constant 0 : index
    %22 = vector.load %arg6[%c0_8, %c0_9, %c0_10] : memref<1x12x64xf32, #tpu.memory_space<vmem>>, vector<1x12x64xf32>
    %23 = vector.shape_cast %22 : vector<1x12x64xf32> to vector<12x64xf32>
    %24 = vector.shape_cast %21 : vector<12x64xf32> to vector<1x12x64xf32>
    tpu.vector_store %arg6[%c0_8, %c0_9, %c0_10], %24 {strides = array<i32>} : memref<1x12x64xf32, #tpu.memory_space<vmem>>, vector<1x12x64xf32>,
    %c0_11 = arith.constant 0 : index
    %c0_12 = arith.constant 0 : index
    %c0_13 = arith.constant 0 : index
    %25 = vector.load %arg4[%c0_11, %c0_12, %c0_13] : memref<8x128x1xf32, #tpu.memory_space<vmem>>, vector<8x128x1xf32>
    %26 = vector.extract_strided_slice %25 {offsets = [0, 0, 0], sizes = [1, 128, 1], strides = [1, 1, 1]} : vector<8x128x1xf32> to vector<1x128x1xf32>
    %27 = vector.shape_cast %26 : vector<1x128x1xf32> to vector<128x1xf32>
    %28 = vector.extract_strided_slice %21 {offsets = [0, 0], sizes = [1, 64], strides = [1, 1]} : vector<12x64xf32> to vector<1x64xf32>
    %29 = vector.broadcast %27 : vector<128x1xf32> to vector<128x64xf32>
    %30 = arith.subf %9, %29 : vector<128x64xf32>
    %31 = vector.broadcast %28 : vector<1x64xf32> to vector<128x64xf32>
    %32 = arith.mulf %30, %31 : vector<128x64xf32>
    %c0_14 = arith.constant 0 : index
    %c0_15 = arith.constant 0 : index
    %c0_16 = arith.constant 0 : index
    %c0_17 = arith.constant 0 : index
    %33 = vector.load %arg5[%c0_14, %c0_15, %c0_16, %c0_17] : memref<1x8x128x64xf32, #tpu.memory_space<vmem>>, vector<1x1x128x64xf32>
    %34 = vector.shape_cast %33 : vector<1x1x128x64xf32> to vector<128x64xf32>
    %35 = vector.shape_cast %32 : vector<128x64xf32> to vector<1x1x128x64xf32>
    tpu.vector_store %arg5[%c0_14, %c0_15, %c0_16, %c0_17], %35 {strides = array<i32>} : memref<1x8x128x64xf32, #tpu.memory_space<vmem>>, vector<1x1x128x64xf32>,
    %36 = vector.extract_strided_slice %25 {offsets = [1, 0, 0], sizes = [1, 128, 1], strides = [1, 1, 1]} : vector<8x128x1xf32> to vector<1x128x1xf32>
    %37 = vector.shape_cast %36 : vector<1x128x1xf32> to vector<128x1xf32>
    %38 = vector.extract_strided_slice %21 {offsets = [1, 0], sizes = [1, 64], strides = [1, 1]} : vector<12x64xf32> to vector<1x64xf32>
    %39 = vector.broadcast %37 : vector<128x1xf32> to vector<128x64xf32>
    %40 = arith.subf %9, %39 : vector<128x64xf32>
    %41 = vector.broadcast %38 : vector<1x64xf32> to vector<128x64xf32>
    %42 = arith.mulf %40, %41 : vector<128x64xf32>
    %c0_18 = arith.constant 0 : index
    %c1 = arith.constant 1 : index
    %c0_19 = arith.constant 0 : index
    %c0_20 = arith.constant 0 : index
    %43 = vector.load %arg5[%c0_18, %c1, %c0_19, %c0_20] : memref<1x8x128x64xf32, #tpu.memory_space<vmem>>, vector<1x1x128x64xf32>
    %44 = vector.shape_cast %43 : vector<1x1x128x64xf32> to vector<128x64xf32>
    %45 = vector.shape_cast %42 : vector<128x64xf32> to vector<1x1x128x64xf32>
    tpu.vector_store %arg5[%c0_18, %c1, %c0_19, %c0_20], %45 {strides = array<i32>} : memref<1x8x128x64xf32, #tpu.memory_space<vmem>>, vector<1x1x128x64xf32>,
    %46 = vector.extract_strided_slice %25 {offsets = [2, 0, 0], sizes = [1, 128, 1], strides = [1, 1, 1]} : vector<8x128x1xf32> to vector<1x128x1xf32>
    %47 = vector.shape_cast %46 : vector<1x128x1xf32> to vector<128x1xf32>
    %48 = vector.extract_strided_slice %21 {offsets = [2, 0], sizes = [1, 64], strides = [1, 1]} : vector<12x64xf32> to vector<1x64xf32>
    %49 = vector.broadcast %47 : vector<128x1xf32> to vector<128x64xf32>
    %50 = arith.subf %9, %49 : vector<128x64xf32>
    %51 = vector.broadcast %48 : vector<1x64xf32> to vector<128x64xf32>
    %52 = arith.mulf %50, %51 : vector<128x64xf32>
    %c0_21 = arith.constant 0 : index
    %c2 = arith.constant 2 : index
    %c0_22 = arith.constant 0 : index
    %c0_23 = arith.constant 0 : index
    %53 = vector.load %arg5[%c0_21, %c2, %c0_22, %c0_23] : memref<1x8x128x64xf32, #tpu.memory_space<vmem>>, vector<1x1x128x64xf32>
    %54 = vector.shape_cast %53 : vector<1x1x128x64xf32> to vector<128x64xf32>
    %55 = vector.shape_cast %52 : vector<128x64xf32> to vector<1x1x128x64xf32>
    tpu.vector_store %arg5[%c0_21, %c2, %c0_22, %c0_23], %55 {strides = array<i32>} : memref<1x8x128x64xf32, #tpu.memory_space<vmem>>, vector<1x1x128x64xf32>,
    %56 = vector.extract_strided_slice %25 {offsets = [3, 0, 0], sizes = [1, 128, 1], strides = [1, 1, 1]} : vector<8x128x1xf32> to vector<1x128x1xf32>
    %57 = vector.shape_cast %56 : vector<1x128x1xf32> to vector<128x1xf32>
    %58 = vector.extract_strided_slice %21 {offsets = [3, 0], sizes = [1, 64], strides = [1, 1]} : vector<12x64xf32> to vector<1x64xf32>
    %59 = vector.broadcast %57 : vector<128x1xf32> to vector<128x64xf32>
    %60 = arith.subf %9, %59 : vector<128x64xf32>
    %61 = vector.broadcast %58 : vector<1x64xf32> to vector<128x64xf32>
    %62 = arith.mulf %60, %61 : vector<128x64xf32>
    %c0_24 = arith.constant 0 : index
    %c3 = arith.constant 3 : index
    %c0_25 = arith.constant 0 : index
    %c0_26 = arith.constant 0 : index
    %63 = vector.load %arg5[%c0_24, %c3, %c0_25, %c0_26] : memref<1x8x128x64xf32, #tpu.memory_space<vmem>>, vector<1x1x128x64xf32>
    %64 = vector.shape_cast %63 : vector<1x1x128x64xf32> to vector<128x64xf32>
    %65 = vector.shape_cast %62 : vector<128x64xf32> to vector<1x1x128x64xf32>
    tpu.vector_store %arg5[%c0_24, %c3, %c0_25, %c0_26], %65 {strides = array<i32>} : memref<1x8x128x64xf32, #tpu.memory_space<vmem>>, vector<1x1x128x64xf32>,
    %66 = vector.extract_strided_slice %25 {offsets = [4, 0, 0], sizes = [1, 128, 1], strides = [1, 1, 1]} : vector<8x128x1xf32> to vector<1x128x1xf32>
    %67 = vector.shape_cast %66 : vector<1x128x1xf32> to vector<128x1xf32>
    %68 = vector.extract_strided_slice %21 {offsets = [4, 0], sizes = [1, 64], strides = [1, 1]} : vector<12x64xf32> to vector<1x64xf32>
    %69 = vector.broadcast %67 : vector<128x1xf32> to vector<128x64xf32>
    %70 = arith.subf %9, %69 : vector<128x64xf32>
    %71 = vector.broadcast %68 : vector<1x64xf32> to vector<128x64xf32>
    %72 = arith.mulf %70, %71 : vector<128x64xf32>
    %c0_27 = arith.constant 0 : index
    %c4 = arith.constant 4 : index
    %c0_28 = arith.constant 0 : index
    %c0_29 = arith.constant 0 : index
    %73 = vector.load %arg5[%c0_27, %c4, %c0_28, %c0_29] : memref<1x8x128x64xf32, #tpu.memory_space<vmem>>, vector<1x1x128x64xf32>
    %74 = vector.shape_cast %73 : vector<1x1x128x64xf32> to vector<128x64xf32>
    %75 = vector.shape_cast %72 : vector<128x64xf32> to vector<1x1x128x64xf32>
    tpu.vector_store %arg5[%c0_27, %c4, %c0_28, %c0_29], %75 {strides = array<i32>} : memref<1x8x128x64xf32, #tpu.memory_space<vmem>>, vector<1x1x128x64xf32>,
    %76 = vector.extract_strided_slice %25 {offsets = [5, 0, 0], sizes = [1, 128, 1], strides = [1, 1, 1]} : vector<8x128x1xf32> to vector<1x128x1xf32>
    %77 = vector.shape_cast %76 : vector<1x128x1xf32> to vector<128x1xf32>
    %78 = vector.extract_strided_slice %21 {offsets = [5, 0], sizes = [1, 64], strides = [1, 1]} : vector<12x64xf32> to vector<1x64xf32>
    %79 = vector.broadcast %77 : vector<128x1xf32> to vector<128x64xf32>
    %80 = arith.subf %9, %79 : vector<128x64xf32>
    %81 = vector.broadcast %78 : vector<1x64xf32> to vector<128x64xf32>
    %82 = arith.mulf %80, %81 : vector<128x64xf32>
    %c0_30 = arith.constant 0 : index
    %c5 = arith.constant 5 : index
    %c0_31 = arith.constant 0 : index
    %c0_32 = arith.constant 0 : index
    %83 = vector.load %arg5[%c0_30, %c5, %c0_31, %c0_32] : memref<1x8x128x64xf32, #tpu.memory_space<vmem>>, vector<1x1x128x64xf32>
    %84 = vector.shape_cast %83 : vector<1x1x128x64xf32> to vector<128x64xf32>
    %85 = vector.shape_cast %82 : vector<128x64xf32> to vector<1x1x128x64xf32>
    tpu.vector_store %arg5[%c0_30, %c5, %c0_31, %c0_32], %85 {strides = array<i32>} : memref<1x8x128x64xf32, #tpu.memory_space<vmem>>, vector<1x1x128x64xf32>,
    %86 = vector.extract_strided_slice %25 {offsets = [6, 0, 0], sizes = [1, 128, 1], strides = [1, 1, 1]} : vector<8x128x1xf32> to vector<1x128x1xf32>
    %87 = vector.shape_cast %86 : vector<1x128x1xf32> to vector<128x1xf32>
    %88 = vector.extract_strided_slice %21 {offsets = [6, 0], sizes = [1, 64], strides = [1, 1]} : vector<12x64xf32> to vector<1x64xf32>
    %89 = vector.broadcast %87 : vector<128x1xf32> to vector<128x64xf32>
    %90 = arith.subf %9, %89 : vector<128x64xf32>
    %91 = vector.broadcast %88 : vector<1x64xf32> to vector<128x64xf32>
    %92 = arith.mulf %90, %91 : vector<128x64xf32>
    %c0_33 = arith.constant 0 : index
    %c6 = arith.constant 6 : index
    %c0_34 = arith.constant 0 : index
    %c0_35 = arith.constant 0 : index
    %93 = vector.load %arg5[%c0_33, %c6, %c0_34, %c0_35] : memref<1x8x128x64xf32, #tpu.memory_space<vmem>>, vector<1x1x128x64xf32>
    %94 = vector.shape_cast %93 : vector<1x1x128x64xf32> to vector<128x64xf32>
    %95 = vector.shape_cast %92 : vector<128x64xf32> to vector<1x1x128x64xf32>
    tpu.vector_store %arg5[%c0_33, %c6, %c0_34, %c0_35], %95 {strides = array<i32>} : memref<1x8x128x64xf32, #tpu.memory_space<vmem>>, vector<1x1x128x64xf32>,
    %96 = vector.extract_strided_slice %25 {offsets = [7, 0, 0], sizes = [1, 128, 1], strides = [1, 1, 1]} : vector<8x128x1xf32> to vector<1x128x1xf32>
    %97 = vector.shape_cast %96 : vector<1x128x1xf32> to vector<128x1xf32>
    %98 = vector.extract_strided_slice %21 {offsets = [7, 0], sizes = [1, 64], strides = [1, 1]} : vector<12x64xf32> to vector<1x64xf32>
    %99 = vector.broadcast %97 : vector<128x1xf32> to vector<128x64xf32>
    %100 = arith.subf %9, %99 : vector<128x64xf32>
    %101 = vector.broadcast %98 : vector<1x64xf32> to vector<128x64xf32>
    %102 = arith.mulf %100, %101 : vector<128x64xf32>
    %c0_36 = arith.constant 0 : index
    %c7 = arith.constant 7 : index
    %c0_37 = arith.constant 0 : index
    %c0_38 = arith.constant 0 : index
    %103 = vector.load %arg5[%c0_36, %c7, %c0_37, %c0_38] : memref<1x8x128x64xf32, #tpu.memory_space<vmem>>, vector<1x1x128x64xf32>
    %104 = vector.shape_cast %103 : vector<1x1x128x64xf32> to vector<128x64xf32>
    %105 = vector.shape_cast %102 : vector<128x64xf32> to vector<1x1x128x64xf32>
    tpu.vector_store %arg5[%c0_36, %c7, %c0_37, %c0_38], %105 {strides = array<i32>} : memref<1x8x128x64xf32, #tpu.memory_space<vmem>>, vector<1x1x128x64xf32>,
    return
  }
  func.func @transform_0(%arg0: i32, %arg1: i32) -> (i32, i32, i32) {
    %c0_i32 = arith.constant 0 : i32
    %c0_i32_0 = arith.constant 0 : i32
    return %arg0, %c0_i32, %arg1 : i32, i32, i32
  }
  func.func @transform_1(%arg0: i32, %arg1: i32) -> (i32, i32) {
    %c0_i32 = arith.constant 0 : i32
    %c0_i32_0 = arith.constant 0 : i32
    %c0_i32_1 = arith.constant 0 : i32
    return %c0_i32, %c0_i32_0 : i32, i32
  }
  func.func @transform_2(%arg0: i32, %arg1: i32) -> (i32, i32, i32) {
    %c0_i32 = arith.constant 0 : i32
    %c0_i32_0 = arith.constant 0 : i32
    %c0_i32_1 = arith.constant 0 : i32
    %c0_i32_2 = arith.constant 0 : i32
    return %c0_i32, %c0_i32_0, %c0_i32_1 : i32, i32, i32
  }
  func.func @transform_3(%arg0: i32, %arg1: i32) -> (i32, i32, i32, i32) {
    %c0_i32 = arith.constant 0 : i32
    %c0_i32_0 = arith.constant 0 : i32
    %c0_i32_1 = arith.constant 0 : i32
    return %arg0, %c0_i32, %c0_i32_0, %arg1 : i32, i32, i32, i32
  }
  func.func @transform_4(%arg0: i32, %arg1: i32) -> (i32, i32, i32) {
    %c0_i32 = arith.constant 0 : i32
    %c0_i32_0 = arith.constant 0 : i32
    return %arg0, %c0_i32, %arg1 : i32, i32, i32
  }
}

</mosaic_0001>

<llo_original>
// kernel: tpu_custom_call.1
$region0: #{tpu_custom_call.1}
  #allocation0 [shape = 'u32[]', space=smem, size = 0x4, offset = 0x4, fixed_abs, tag = 'smem constant byte address 0x4 - core index']
  #allocation1 [shape = 'u32[144,128]{1,0:T(1,128)}', space=vmem, size = 0x12000, scoped, tag = 'internal scratch']
  %s0 = inlined_call_operand.vmem [shape: f32[2,128,64], index: 0, kind: input, shape index: {}]
  %s1 = inlined_call_operand.vmem [shape: f32[12,128], index: 1, kind: input, shape index: {}]
  %s2 = inlined_call_operand.vmem [shape: f32[8,128,1], index: 2, kind: input, shape index: {}]
  %s3 = inlined_call_operand.vmem [shape: f32[2,8,128,64], index: 3, kind: output, shape index: {0}]
  %s4 = inlined_call_operand.vmem [shape: f32[2,12,64], index: 4, kind: output, shape index: {1}]
  %5 = xla_tuple %s3, %s4
  %s6 = sld [smem:[#allocation0]]
  $region53: #{tpu_custom_call.1} parent=0
    _
  %s8 = ssub.s32 1, %s6
  %s9 = scalar_select 0, %s8, %s6
  loop: start=0, step=1, limit=4
  $region2: #{tpu_custom_call.1} parent=0 // loop_pre_header
    _
  $region3: #{tpu_custom_call.1} parent=0 // loop_header
    %s11 = sphi 0, %s15
    %p12 = scmp.ge.s32.totalorder %s11, 4
    %s18 = sphi 0, %s30
    %s19 = sphi 0, %s26
    %s20 = sphi 0, %s18
    %s21 = sphi 0, %s19
    %s22 = sphi 0, %s20
    %s23 = sphi 0, %s21
    %s35 = sphi 0, %s37
    %s38 = sphi 0, %s35
    %s39 = sphi 0, %s38
    %s55 = sphi 0, %s39
    %s59 = sphi 0, %s59
    %s61 = sphi 0, %s59
    %s62 = sphi 0, %s61
    %s76 = sphi 0, %s62
    %s80 = sphi 0, %s80
    %s82 = sphi 0, %s80
    %s83 = sphi 0, %s82
    %s97 = sphi 0, %s83
    %s105 = sphi 0, %s107
    %s108 = sphi 0, %s105
    %s109 = sphi 0, %s108
    %s125 = sphi 0, %s109
    %s133 = sphi 0, %s135
    %s136 = sphi 0, %s133
    %s137 = sphi 0, %s136
    %s153 = sphi 0, %s137
  $region4: #{tpu_custom_call.1} parent=0 // loop_header_branch
    %14 = sbr.rel (%p12) target = $region8
  $region5: #{tpu_custom_call.1} parent=0 // loop_body
    %s16 = ssub.s32 %s11, 1
    %s17 = ssub.s32 %s11, 2
    %s24 = sadd.s32 1, %s19
    %p25 = scmp.ge.s32.totalorder %s24, 1
    %s26 = scalar_select %p25, 0, %s24
    %s27 = sadd.s32 1, %s18
    %s28 = scalar_select %p25, %s27, %s18
    %p29 = scmp.ge.s32.totalorder %s28, 2
    %s30 = scalar_select %p29, 0, %s28
    %s31 = ssub.s32 %s18, %s30
    %s32 = ssub.s32 %s19, %s26
    %s33 = sor.u32 %s31, %s32
    %p34 = scmp.eq.s32.totalorder %s33, 0
    %s36 = sadd.s32 %s35, 1
    %s37 = scalar_select %p34, %s35, %s36
    %p40 = pneg %p34
    %p41 = scmp.eq.s32.totalorder %s11, 1
    %p42 = por %p40, %p41
    %p43 = scmp.ne.s32.totalorder %s35, %s38
    %p44 = scmp.eq.s32.totalorder %s11, 0
    %p45 = por %p43, %p44
    %p46 = scmp.ne.s32.totalorder %s35, %s38
    %p47 = scmp.eq.s32.totalorder %s16, 1
    %p48 = por %p46, %p47
    %p49 = scmp.ne.s32.totalorder %s38, %s39
    %p50 = scmp.eq.s32.totalorder %s16, 0
    %p51 = por %p49, %p50
    %p52 = scmp.ne.s32.totalorder %s38, %s39
    %p53 = scmp.eq.s32.totalorder %s17, 1
    %p54 = por %p52, %p53
    %p56 = scmp.ne.s32.totalorder %s39, %s55
    %p57 = scmp.eq.s32.totalorder %s17, 0
    %p58 = por %p56, %p57
    %s60 = sadd.s32 %s59, 1
    %p63 = scmp.eq.s32.totalorder %s11, 1
    %p64 = scmp.ne.s32.totalorder %s59, %s61
    %p65 = scmp.eq.s32.totalorder %s11, 0
    %p66 = por %p64, %p65
    %p67 = scmp.ne.s32.totalorder %s59, %s61
    %p68 = scmp.eq.s32.totalorder %s16, 1
    %p69 = por %p67, %p68
    %p70 = scmp.ne.s32.totalorder %s61, %s62
    %p71 = scmp.eq.s32.totalorder %s16, 0
    %p72 = por %p70, %p71
    %p73 = scmp.ne.s32.totalorder %s61, %s62
    %p74 = scmp.eq.s32.totalorder %s17, 1
    %p75 = por %p73, %p74
    %p77 = scmp.ne.s32.totalorder %s62, %s76
    %p78 = scmp.eq.s32.totalorder %s17, 0
    %p79 = por %p77, %p78
    %s81 = sadd.s32 %s80, 1
    %p84 = scmp.eq.s32.totalorder %s11, 1
    %p85 = scmp.ne.s32.totalorder %s80, %s82
    %p86 = scmp.eq.s32.totalorder %s11, 0
    %p87 = por %p85, %p86
    %p88 = scmp.ne.s32.totalorder %s80, %s82
    %p89 = scmp.eq.s32.totalorder %s16, 1
    %p90 = por %p88, %p89
    %p91 = scmp.ne.s32.totalorder %s82, %s83
    %p92 = scmp.eq.s32.totalorder %s16, 0
    %p93 = por %p91, %p92
    %p94 = scmp.ne.s32.totalorder %s82, %s83
    %p95 = scmp.eq.s32.totalorder %s17, 1
    %p96 = por %p94, %p95
    %p98 = scmp.ne.s32.totalorder %s83, %s97
    %p99 = scmp.eq.s32.totalorder %s17, 0
    %p100 = por %p98, %p99
    %s101 = ssub.s32 %s18, %s30
    %s102 = ssub.s32 %s19, %s26
    %s103 = sor.u32 %s101, %s102
    %p104 = scmp.eq.s32.totalorder %s103, 0
    %s106 = sadd.s32 %s105, 1
    %s107 = scalar_select %p104, %s105, %s106
    %p110 = pneg %p104
    %p111 = scmp.eq.s32.totalorder %s11, 1
    %p112 = por %p110, %p111
    %p113 = scmp.ne.s32.totalorder %s105, %s108
    %p114 = scmp.eq.s32.totalorder %s11, 0
    %p115 = por %p113, %p114
    %p116 = scmp.ne.s32.totalorder %s105, %s108
    %p117 = scmp.eq.s32.totalorder %s16, 1
    %p118 = por %p116, %p117
    %p119 = scmp.ne.s32.totalorder %s108, %s109
    %p120 = scmp.eq.s32.totalorder %s16, 0
    %p121 = por %p119, %p120
    %p122 = scmp.ne.s32.totalorder %s108, %s109
    %p123 = scmp.eq.s32.totalorder %s17, 1
    %p124 = por %p122, %p123
    %p126 = scmp.ne.s32.totalorder %s109, %s125
    %p127 = scmp.eq.s32.totalorder %s17, 0
    %p128 = por %p126, %p127
    %s129 = ssub.s32 %s18, %s30
    %s130 = ssub.s32 %s19, %s26
    %s131 = sor.u32 %s129, %s130
    %p132 = scmp.eq.s32.totalorder %s131, 0
    %s134 = sadd.s32 %s133, 1
    %s135 = scalar_select %p132, %s133, %s134
    %p138 = pneg %p132
    %p139 = scmp.eq.s32.totalorder %s11, 1
    %p140 = por %p138, %p139
    %p141 = scmp.ne.s32.totalorder %s133, %s136
    %p142 = scmp.eq.s32.totalorder %s11, 0
    %p143 = por %p141, %p142
    %p144 = scmp.ne.s32.totalorder %s133, %s136
    %p145 = scmp.eq.s32.totalorder %s16, 1
    %p146 = por %p144, %p145
    %p147 = scmp.ne.s32.totalorder %s136, %s137
    %p148 = scmp.eq.s32.totalorder %s16, 0
    %p149 = por %p147, %p148
    %p150 = scmp.ne.s32.totalorder %s136, %s137
    %p151 = scmp.eq.s32.totalorder %s17, 1
    %p152 = por %p150, %p151
    %p154 = scmp.ne.s32.totalorder %s137, %s153
    %p155 = scmp.eq.s32.totalorder %s17, 0
    %p156 = por %p154, %p155
    %p157 = scmp.le.s32.totalorder 1, %s11
    %p158 = scmp.lt.s32.totalorder %s11, 3
    %p159 = pnand %p157, %p158
    %p160 = pneg %p159
    // Predicated region
    $region9: #{tpu_custom_call.1} parent=5 // pred_check
      _
    $region10: #{tpu_custom_call.1} parent=5 // pred_check_branch
      %162 = sbr.rel (%p159) target = $region12
    $region11: #{tpu_custom_call.1} parent=5 // pred_region
      %s163 = ssub.s32 %s11, 1
      // Predicated region
      $region13: #{tpu_custom_call.1} parent=11 // pred_check
        %p164 = pneg %p72
      $region14: #{tpu_custom_call.1} parent=11 // pred_check_branch
        %166 = sbr.rel (%p164) target = $region16
      $region15: #{tpu_custom_call.1} parent=11 // pred_region
        _
      $region16: #{tpu_custom_call.1} parent=11 // pred_fallthru
        _
      // Predicated region
      $region17: #{tpu_custom_call.1} parent=11 // pred_check
        %p167 = pneg %p93
      $region18: #{tpu_custom_call.1} parent=11 // pred_check_branch
        %169 = sbr.rel (%p167) target = $region20
      $region19: #{tpu_custom_call.1} parent=11 // pred_region
        _
      $region20: #{tpu_custom_call.1} parent=11 // pred_fallthru
        _
    $region12: #{tpu_custom_call.1} parent=5 // pred_fallthru
      _
    %p170 = scmp.lt.s32.totalorder %s11, 2
    // Predicated region
    $region21: #{tpu_custom_call.1} parent=5 // pred_check
      %p171 = pneg %p170
    $region22: #{tpu_custom_call.1} parent=5 // pred_check_branch
      %173 = sbr.rel (%p171) target = $region24
    $region23: #{tpu_custom_call.1} parent=5 // pred_region
      // Predicated region
      $region25: #{tpu_custom_call.1} parent=23 // pred_check
        %p174 = pneg %p45
      $region26: #{tpu_custom_call.1} parent=23 // pred_check_branch
        %176 = sbr.rel (%p174) target = $region28
      $region27: #{tpu_custom_call.1} parent=23 // pred_region
        %p177 = scmp.lt.s32.totalorder %s18, 1
        %s178 = scalar_select %p177, %s18, 1
        %p179 = scmp.lt.s32.totalorder %s19, 0
        %s180 = scalar_select %p179, %s19, 0
        %s181 = smul.addr %s178, 16
        %s182 = sadd.s32 %s180, %s181
        %s183 = smul.addr %s182, 8
        %s184 = scalar_lea.vmem %s0, %s183
      $region28: #{tpu_custom_call.1} parent=23 // pred_fallthru
        _
    $region24: #{tpu_custom_call.1} parent=5 // pred_fallthru
      _
    %p185 = scmp.le.s32.totalorder 1, %s11
    %p186 = scmp.lt.s32.totalorder %s11, 3
    %p187 = pnand %p185, %p186
    %p188 = pneg %p187
    // Predicated region
    $region29: #{tpu_custom_call.1} parent=5 // pred_check
      _
    $region30: #{tpu_custom_call.1} parent=5 // pred_check_branch
      %190 = sbr.rel (%p187) target = $region32
    $region31: #{tpu_custom_call.1} parent=5 // pred_region
      %s191 = ssub.s32 %s11, 1
      %p192 = scmp.lt.s32.totalorder %s20, 1
      %s193 = scalar_select %p192, %s20, 1
      %p194 = scmp.lt.s32.totalorder %s21, 0
      %s195 = scalar_select %p194, %s21, 0
      %s196 = smul.addr %s193, 16
      %s197 = sadd.s32 %s195, %s196
      %s198 = smul.addr %s197, 8
      %s199 = scalar_lea.vmem %s0, %s198
      %p200 = pneg %p51
      %p201 = pneg %p48
      %p202 = pneg %p72
      %p203 = pneg %p69
      %p204 = pneg %p93
      %p205 = pneg %p90
      %p206 = pneg %p121
      %p207 = pneg %p118
      %p208 = scmp.lt.s32.totalorder %s20, 1
      %s209 = scalar_select %p208, %s20, 1
      %p210 = scmp.lt.s32.totalorder %s21, 0
      %s211 = scalar_select %p210, %s21, 0
      %s212 = smul.addr %s209, 128
      %s213 = sadd.s32 %s211, %s212
      %s214 = smul.addr %s213, 8
      %s215 = scalar_lea.vmem %s3, %s214
      %p216 = pneg %p149
      %p217 = pneg %p146
      %p218 = scmp.lt.s32.totalorder %s20, 1
      %s219 = scalar_select %p218, %s20, 1
      %p220 = scmp.lt.s32.totalorder %s21, 0
      %s221 = scalar_select %p220, %s21, 0
      %s222 = smul.addr %s219, 2
      %s223 = sadd.s32 %s221, %s222
      %s224 = smul.addr %s223, 8
      %s225 = scalar_lea.vmem %s4, %s224
      %p226 = scmp.lt.s32.totalorder %s20, 1
      %s227 = scalar_select %p226, %s20, 1
      %p228 = scmp.lt.s32.totalorder %s21, 0
      %s229 = scalar_select %p228, %s21, 0
      %s230 = smul.addr %s227, 16
      %s231 = sadd.s32 %s229, %s230
      %s232 = smul.addr %s231, 8
      %s233 = scalar_lea.vmem %s0, %s232
      %p234 = scmp.lt.s32.totalorder %s20, 1
      %s235 = scalar_select %p234, %s20, 1
      %p236 = scmp.lt.s32.totalorder %s21, 0
      %s237 = scalar_select %p236, %s21, 0
      %s238 = smul.addr %s235, 128
      %s239 = sadd.s32 %s237, %s238
      %s240 = smul.addr %s239, 8
      %s241 = scalar_lea.vmem %s3, %s240
      %p242 = scmp.lt.s32.totalorder %s20, 1
      %s243 = scalar_select %p242, %s20, 1
      %p244 = scmp.lt.s32.totalorder %s21, 0
      %s245 = scalar_select %p244, %s21, 0
      %s246 = smul.addr %s243, 2
      %s247 = sadd.s32 %s245, %s246
      %s248 = smul.addr %s247, 8
      %s249 = scalar_lea.vmem %s4, %s248
      %v250 = vld [vmem:[%s233] sm:$0xff]
      %v251 = vld [vmem:[%s233 + $0x8] sm:$0xff]
      %v252 = vld [vmem:[%s233 + $0x10] sm:$0xff]
      %v253 = vld [vmem:[%s233 + $0x18] sm:$0xff]
      %v254 = vld [vmem:[%s233 + $0x20] sm:$0xff]
      %v255 = vld [vmem:[%s233 + $0x28] sm:$0xff]
      %v256 = vld [vmem:[%s233 + $0x30] sm:$0xff]
      %v257 = vld [vmem:[%s233 + $0x38] sm:$0xff]
      %v258 = vld [vmem:[%s233 + $0x40] sm:$0xff]
      %v259 = vld [vmem:[%s233 + $0x48] sm:$0xff]
      %v260 = vld [vmem:[%s233 + $0x50] sm:$0xff]
      %v261 = vld [vmem:[%s233 + $0x58] sm:$0xff]
      %v262 = vld [vmem:[%s233 + $0x60] sm:$0xff]
      %v263 = vld [vmem:[%s233 + $0x68] sm:$0xff]
      %v264 = vld [vmem:[%s233 + $0x70] sm:$0xff]
      %v265 = vld [vmem:[%s233 + $0x78] sm:$0xff]
      %v266 = vmul.f32 %v250, %v250
      %v267 = vmul.f32 %v251, %v251
      %v268 = vmul.f32 %v252, %v252
      %v269 = vmul.f32 %v253, %v253
      %v270 = vmul.f32 %v254, %v254
      %v271 = vmul.f32 %v255, %v255
      %v272 = vmul.f32 %v256, %v256
      %v273 = vmul.f32 %v257, %v257
      %v274 = vmul.f32 %v258, %v258
      %v275 = vmul.f32 %v259, %v259
      %v276 = vmul.f32 %v260, %v260
      %v277 = vmul.f32 %v261, %v261
      %v278 = vmul.f32 %v262, %v262
      %v279 = vmul.f32 %v263, %v263
      %v280 = vmul.f32 %v264, %v264
      %v281 = vmul.f32 %v265, %v265
      %vm282 = vcmask 523264
      %v283 = vsel %vm282, %v266, 0.0
      %v284 = vsel %vm282, %v267, 0.0
      %v285 = vadd.f32 %v283, %v284
      %v286 = vsel %vm282, %v268, 0.0
      %v287 = vadd.f32 %v285, %v286
      %v288 = vsel %vm282, %v269, 0.0
      %v289 = vadd.f32 %v287, %v288
      %v290 = vsel %vm282, %v270, 0.0
      %v291 = vadd.f32 %v289, %v290
      %v292 = vsel %vm282, %v271, 0.0
      %v293 = vadd.f32 %v291, %v292
      %v294 = vsel %vm282, %v272, 0.0
      %v295 = vadd.f32 %v293, %v294
      %v296 = vsel %vm282, %v273, 0.0
      %v297 = vadd.f32 %v295, %v296
      %v298 = vsel %vm282, %v274, 0.0
      %v299 = vadd.f32 %v297, %v298
      %v300 = vsel %vm282, %v275, 0.0
      %v301 = vadd.f32 %v299, %v300
      %v302 = vsel %vm282, %v276, 0.0
      %v303 = vadd.f32 %v301, %v302
      %v304 = vsel %vm282, %v277, 0.0
      %v305 = vadd.f32 %v303, %v304
      %v306 = vsel %vm282, %v278, 0.0
      %v307 = vadd.f32 %v305, %v306
      %v308 = vsel %vm282, %v279, 0.0
      %v309 = vadd.f32 %v307, %v308
      %v310 = vsel %vm282, %v280, 0.0
      %v311 = vadd.f32 %v309, %v310
      %v312 = vsel %vm282, %v281, 0.0
      %v313 = vadd.f32 %v311, %v312
      %v314 = vrot.slane %v313, 4
      %v315 = vadd.f32 %v313, %v314
      %v316 = vrot.slane %v315, 2
      %v317 = vadd.f32 %v315, %v316
      %v318 = vrot.slane %v317, 1
      %v319 = vadd.f32 %v317, %v318
      %v320 = vmax.f32 %v319, 1e-24
      %v321 = vrsqrt.pop %v320
      %v322 = vmul.f32 %v250, %v321
      %v323 = vmul.f32 %v251, %v321
      %v324 = vmul.f32 %v252, %v321
      %v325 = vmul.f32 %v253, %v321
      %v326 = vmul.f32 %v254, %v321
      %v327 = vmul.f32 %v255, %v321
      %v328 = vmul.f32 %v256, %v321
      %v329 = vmul.f32 %v257, %v321
      %v330 = vmul.f32 %v258, %v321
      %v331 = vmul.f32 %v259, %v321
      %v332 = vmul.f32 %v260, %v321
      %v333 = vmul.f32 %v261, %v321
      %v334 = vmul.f32 %v262, %v321
      %v335 = vmul.f32 %v263, %v321
      %v336 = vmul.f32 %v264, %v321
      %v337 = vmul.f32 %v265, %v321
      %v338 = vld [vmem:[%s1] sm:$0xff]
      %v339 = vld [vmem:[%s1 + $0x8] sm:$0xf]
      %340 = vmatprep.subr.mxu0 0.0
      %v341 = vand.u32 %v322, 4294901760
      %342 = vmatpush1.msra.mxu0 %v341
      %343 = vmatprep.subr.mxu0 0.0
      %v344 = vand.u32 %v323, 4294901760
      %345 = vmatpush1.msra.mxu0 %v344
      %346 = vmatprep.subr.mxu0 0.0
      %v347 = vand.u32 %v324, 4294901760
      %348 = vmatpush1.msra.mxu0 %v347
      %349 = vmatprep.subr.mxu0 0.0
      %v350 = vand.u32 %v325, 4294901760
      %351 = vmatpush1.msra.mxu0 %v350
      %352 = vmatprep.subr.mxu0 0.0
      %v353 = vand.u32 %v326, 4294901760
      %354 = vmatpush1.msra.mxu0 %v353
      %355 = vmatprep.subr.mxu0 0.0
      %v356 = vand.u32 %v327, 4294901760
      %357 = vmatpush1.msra.mxu0 %v356
      %358 = vmatprep.subr.mxu0 0.0
      %v359 = vand.u32 %v328, 4294901760
      %360 = vmatpush1.msra.mxu0 %v359
      %361 = vmatprep.subr.mxu0 0.0
      %v362 = vand.u32 %v329, 4294901760
      %363 = vmatpush1.msra.mxu0 %v362
      %364 = vmatprep.subr.mxu0 0.0
      %v365 = vand.u32 %v330, 4294901760
      %366 = vmatpush1.msra.mxu0 %v365
      %367 = vmatprep.subr.mxu0 0.0
      %v368 = vand.u32 %v331, 4294901760
      %369 = vmatpush1.msra.mxu0 %v368
      %370 = vmatprep.subr.mxu0 0.0
      %v371 = vand.u32 %v332, 4294901760
      %372 = vmatpush1.msra.mxu0 %v371
      %373 = vmatprep.subr.mxu0 0.0
      %v374 = vand.u32 %v333, 4294901760
      %375 = vmatpush1.msra.mxu0 %v374
      %376 = vmatprep.subr.mxu0 0.0
      %v377 = vand.u32 %v334, 4294901760
      %378 = vmatpush1.msra.mxu0 %v377
      %379 = vmatprep.subr.mxu0 0.0
      %v380 = vand.u32 %v335, 4294901760
      %381 = vmatpush1.msra.mxu0 %v380
      %382 = vmatprep.subr.mxu0 0.0
      %v383 = vand.u32 %v336, 4294901760
      %384 = vmatpush1.msra.mxu0 %v383
      %385 = vmatprep.subr.mxu0 0.0
      %v386 = vand.u32 %v337, 4294901760
      %387 = vmatpush1.msra.mxu0 %v386
      %388 = vmatprep.subr.mxu0 0.0
      %389 = vmatpush1.msra.mxu0 0.0
      %390 = vmatprep.subr.mxu0 0.0
      %391 = vmatpush1.msra.mxu0 0.0
      %392 = vmatprep.subr.mxu0 0.0
      %393 = vmatpush1.msra.mxu0 0.0
      %394 = vmatprep.subr.mxu0 0.0
      %395 = vmatpush1.msra.mxu0 0.0
      %396 = vmatprep.subr.mxu0 0.0
      %397 = vmatpush1.msra.mxu0 0.0
      %398 = vmatprep.subr.mxu0 0.0
      %399 = vmatpush1.msra.mxu0 0.0
      %400 = vmatprep.subr.mxu0 0.0
      %401 = vmatpush1.msra.mxu0 0.0
      %402 = vmatprep.subr.mxu0 0.0
      %403 = vmatpush1.msra.mxu0 0.0
      %404 = vmatprep.subr.mxu0 0.0
      %405 = vmatpush1.msra.mxu0 0.0
      %406 = vmatprep.subr.mxu0 0.0
      %407 = vmatpush1.msra.mxu0 0.0
      %408 = vmatprep.subr.mxu0 0.0
      %409 = vmatpush1.msra.mxu0 0.0
      %410 = vmatprep.subr.mxu0 0.0
      %411 = vmatpush1.msra.mxu0 0.0
      %412 = vmatprep.subr.mxu0 0.0
      %413 = vmatpush1.msra.mxu0 0.0
      %414 = vmatprep.subr.mxu0 0.0
      %415 = vmatpush1.msra.mxu0 0.0
      %416 = vmatprep.subr.mxu0 0.0
      %417 = vmatpush1.msra.mxu0 0.0
      %418 = vmatprep.subr.mxu0 0.0
      %419 = vmatpush1.msra.mxu0 0.0
      %420 = vmatprep.mubr.f32.mxu0 0.0
      %v421 = vand.u32 %v338, 4294901760
      %v422 = vsub.f32 %v338, %v421
      %v423 = vand.u32 %v422, 4294901760
      %v424 = vsub.f32 %v422, %v423
      %v425 = vand.u32 %v424, 4294901760
      %426 = vmatmul.mubr.f32.gmra.mrb[0].mxu0 %v425
      %v427 = vpop.f32.mrb[0].mxu0
      %v428 = vadd.f32 0.0, %v427
      %v429 = vpop.f32.mrb[0].mxu0
      %430 = vmatprep.mubr.f32.mxu0 0.0
      %v431 = vand.u32 %v339, 4294901760
      %v432 = vsub.f32 %v339, %v431
      %v433 = vand.u32 %v432, 4294901760
      %v434 = vsub.f32 %v432, %v433
      %v435 = vand.u32 %v434, 4294901760
      %436 = vmatmul.mubr.f32.gmra.mrb[0].mxu0 %v435
      %v437 = vpop.f32.mrb[0].mxu0
      %v438 = vadd.f32 0.0, %v437
      %v439 = vpop.f32.mrb[0].mxu0
      %440 = vdwg.mxu0
      %441 = vmatprep.subr.mxu0 0.0
      %v442 = vand.u32 %v322, 4294901760
      %v443 = vsub.f32 %v322, %v442
      %v444 = vand.u32 %v443, 4294901760
      %v445 = vsub.f32 %v443, %v444
      %v446 = vand.u32 %v445, 4294901760
      %447 = vmatpush1.msra.mxu0 %v446
      %448 = vmatprep.subr.mxu0 0.0
      %v449 = vand.u32 %v323, 4294901760
      %v450 = vsub.f32 %v323, %v449
      %v451 = vand.u32 %v450, 4294901760
      %v452 = vsub.f32 %v450, %v451
      %v453 = vand.u32 %v452, 4294901760
      %454 = vmatpush1.msra.mxu0 %v453
      %455 = vmatprep.subr.mxu0 0.0
      %v456 = vand.u32 %v324, 4294901760
      %v457 = vsub.f32 %v324, %v456
      %v458 = vand.u32 %v457, 4294901760
      %v459 = vsub.f32 %v457, %v458
      %v460 = vand.u32 %v459, 4294901760
      %461 = vmatpush1.msra.mxu0 %v460
      %462 = vmatprep.subr.mxu0 0.0
      %v463 = vand.u32 %v325, 4294901760
      %v464 = vsub.f32 %v325, %v463
      %v465 = vand.u32 %v464, 4294901760
      %v466 = vsub.f32 %v464, %v465
      %v467 = vand.u32 %v466, 4294901760
      %468 = vmatpush1.msra.mxu0 %v467
      %469 = vmatprep.subr.mxu0 0.0
      %v470 = vand.u32 %v326, 4294901760
      %v471 = vsub.f32 %v326, %v470
      %v472 = vand.u32 %v471, 4294901760
      %v473 = vsub.f32 %v471, %v472
      %v474 = vand.u32 %v473, 4294901760
      %475 = vmatpush1.msra.mxu0 %v474
      %476 = vmatprep.subr.mxu0 0.0
      %v477 = vand.u32 %v327, 4294901760
      %v478 = vsub.f32 %v327, %v477
      %v479 = vand.u32 %v478, 4294901760
      %v480 = vsub.f32 %v478, %v479
      %v481 = vand.u32 %v480, 4294901760
      %482 = vmatpush1.msra.mxu0 %v481
      %483 = vmatprep.subr.mxu0 0.0
      %v484 = vand.u32 %v328, 4294901760
      %v485 = vsub.f32 %v328, %v484
      %v486 = vand.u32 %v485, 4294901760
      %v487 = vsub.f32 %v485, %v486
      %v488 = vand.u32 %v487, 4294901760
      %489 = vmatpush1.msra.mxu0 %v488
      %490 = vmatprep.subr.mxu0 0.0
      %v491 = vand.u32 %v329, 4294901760
      %v492 = vsub.f32 %v329, %v491
      %v493 = vand.u32 %v492, 4294901760
      %v494 = vsub.f32 %v492, %v493
      %v495 = vand.u32 %v494, 4294901760
      %496 = vmatpush1.msra.mxu0 %v495
      %497 = vmatprep.subr.mxu0 0.0
      %v498 = vand.u32 %v330, 4294901760
      %v499 = vsub.f32 %v330, %v498
      %v500 = vand.u32 %v499, 4294901760
      %v501 = vsub.f32 %v499, %v500
      %v502 = vand.u32 %v501, 4294901760
      %503 = vmatpush1.msra.mxu0 %v502
      %504 = vmatprep.subr.mxu0 0.0
      %v505 = vand.u32 %v331, 4294901760
      %v506 = vsub.f32 %v331, %v505
      %v507 = vand.u32 %v506, 4294901760
      %v508 = vsub.f32 %v506, %v507
      %v509 = vand.u32 %v508, 4294901760
      %510 = vmatpush1.msra.mxu0 %v509
      %511 = vmatprep.subr.mxu0 0.0
      %v512 = vand.u32 %v332, 4294901760
      %v513 = vsub.f32 %v332, %v512
      %v514 = vand.u32 %v513, 4294901760
      %v515 = vsub.f32 %v513, %v514
      %v516 = vand.u32 %v515, 4294901760
      %517 = vmatpush1.msra.mxu0 %v516
      %518 = vmatprep.subr.mxu0 0.0
      %v519 = vand.u32 %v333, 4294901760
      %v520 = vsub.f32 %v333, %v519
      %v521 = vand.u32 %v520, 4294901760
      %v522 = vsub.f32 %v520, %v521
      %v523 = vand.u32 %v522, 4294901760
      %524 = vmatpush1.msra.mxu0 %v523
      %525 = vmatprep.subr.mxu0 0.0
      %v526 = vand.u32 %v334, 4294901760
      %v527 = vsub.f32 %v334, %v526
      %v528 = vand.u32 %v527, 4294901760
      %v529 = vsub.f32 %v527, %v528
      %v530 = vand.u32 %v529, 4294901760
      %531 = vmatpush1.msra.mxu0 %v530
      %532 = vmatprep.subr.mxu0 0.0
      %v533 = vand.u32 %v335, 4294901760
      %v534 = vsub.f32 %v335, %v533
      %v535 = vand.u32 %v534, 4294901760
      %v536 = vsub.f32 %v534, %v535
      %v537 = vand.u32 %v536, 4294901760
      %538 = vmatpush1.msra.mxu0 %v537
      %539 = vmatprep.subr.mxu0 0.0
      %v540 = vand.u32 %v336, 4294901760
      %v541 = vsub.f32 %v336, %v540
      %v542 = vand.u32 %v541, 4294901760
      %v543 = vsub.f32 %v541, %v542
      %v544 = vand.u32 %v543, 4294901760
      %545 = vmatpush1.msra.mxu0 %v544
      %546 = vmatprep.subr.mxu0 0.0
      %v547 = vand.u32 %v337, 4294901760
      %v548 = vsub.f32 %v337, %v547
      %v549 = vand.u32 %v548, 4294901760
      %v550 = vsub.f32 %v548, %v549
      %v551 = vand.u32 %v550, 4294901760
      %552 = vmatpush1.msra.mxu0 %v551
      %553 = vmatprep.subr.mxu0 0.0
      %554 = vmatpush1.msra.mxu0 0.0
      %555 = vmatprep.subr.mxu0 0.0
      %556 = vmatpush1.msra.mxu0 0.0
      %557 = vmatprep.subr.mxu0 0.0
      %558 = vmatpush1.msra.mxu0 0.0
      %559 = vmatprep.subr.mxu0 0.0
      %560 = vmatpush1.msra.mxu0 0.0
      %561 = vmatprep.subr.mxu0 0.0
      %562 = vmatpush1.msra.mxu0 0.0
      %563 = vmatprep.subr.mxu0 0.0
      %564 = vmatpush1.msra.mxu0 0.0
      %565 = vmatprep.subr.mxu0 0.0
      %566 = vmatpush1.msra.mxu0 0.0
      %567 = vmatprep.subr.mxu0 0.0
      %568 = vmatpush1.msra.mxu0 0.0
      %569 = vmatprep.subr.mxu0 0.0
      %570 = vmatpush1.msra.mxu0 0.0
      %571 = vmatprep.subr.mxu0 0.0
      %572 = vmatpush1.msra.mxu0 0.0
      %573 = vmatprep.subr.mxu0 0.0
      %574 = vmatpush1.msra.mxu0 0.0
      %575 = vmatprep.subr.mxu0 0.0
      %576 = vmatpush1.msra.mxu0 0.0
      %577 = vmatprep.subr.mxu0 0.0
      %578 = vmatpush1.msra.mxu0 0.0
      %579 = vmatprep.subr.mxu0 0.0
      %580 = vmatpush1.msra.mxu0 0.0
      %581 = vmatprep.subr.mxu0 0.0
      %582 = vmatpush1.msra.mxu0 0.0
      %583 = vmatprep.subr.mxu0 0.0
      %584 = vmatpush1.msra.mxu0 0.0
      %585 = vmatprep.mubr.f32.mxu0 0.0
      %v586 = vand.u32 %v338, 4294901760
      %587 = vmatmul.mubr.f32.gmra.mrb[0].mxu0 %v586
      %v588 = vpop.f32.mrb[0].mxu0
      %v589 = vadd.f32 %v428, %v588
      %v590 = vpop.f32.mrb[0].mxu0
      %591 = vmatprep.mubr.f32.mxu0 0.0
      %v592 = vand.u32 %v339, 4294901760
      %593 = vmatmul.mubr.f32.gmra.mrb[0].mxu0 %v592
      %v594 = vpop.f32.mrb[0].mxu0
      %v595 = vadd.f32 %v438, %v594
      %v596 = vpop.f32.mrb[0].mxu0
      %597 = vdwg.mxu0
      %598 = vmatprep.subr.mxu0 0.0
      %v599 = vand.u32 %v322, 4294901760
      %v600 = vsub.f32 %v322, %v599
      %601 = vmatpush1.msra.mxu0 %v600
      %602 = vmatprep.subr.mxu0 0.0
      %v603 = vand.u32 %v323, 4294901760
      %v604 = vsub.f32 %v323, %v603
      %605 = vmatpush1.msra.mxu0 %v604
      %606 = vmatprep.subr.mxu0 0.0
      %v607 = vand.u32 %v324, 4294901760
      %v608 = vsub.f32 %v324, %v607
      %609 = vmatpush1.msra.mxu0 %v608
      %610 = vmatprep.subr.mxu0 0.0
      %v611 = vand.u32 %v325, 4294901760
      %v612 = vsub.f32 %v325, %v611
      %613 = vmatpush1.msra.mxu0 %v612
      %614 = vmatprep.subr.mxu0 0.0
      %v615 = vand.u32 %v326, 4294901760
      %v616 = vsub.f32 %v326, %v615
      %617 = vmatpush1.msra.mxu0 %v616
      %618 = vmatprep.subr.mxu0 0.0
      %v619 = vand.u32 %v327, 4294901760
      %v620 = vsub.f32 %v327, %v619
      %621 = vmatpush1.msra.mxu0 %v620
      %622 = vmatprep.subr.mxu0 0.0
      %v623 = vand.u32 %v328, 4294901760
      %v624 = vsub.f32 %v328, %v623
      %625 = vmatpush1.msra.mxu0 %v624
      %626 = vmatprep.subr.mxu0 0.0
      %v627 = vand.u32 %v329, 4294901760
      %v628 = vsub.f32 %v329, %v627
      %629 = vmatpush1.msra.mxu0 %v628
      %630 = vmatprep.subr.mxu0 0.0
      %v631 = vand.u32 %v330, 4294901760
      %v632 = vsub.f32 %v330, %v631
      %633 = vmatpush1.msra.mxu0 %v632
      %634 = vmatprep.subr.mxu0 0.0
      %v635 = vand.u32 %v331, 4294901760
      %v636 = vsub.f32 %v331, %v635
      %637 = vmatpush1.msra.mxu0 %v636
      %638 = vmatprep.subr.mxu0 0.0
      %v639 = vand.u32 %v332, 4294901760
      %v640 = vsub.f32 %v332, %v639
      %641 = vmatpush1.msra.mxu0 %v640
      %642 = vmatprep.subr.mxu0 0.0
      %v643 = vand.u32 %v333, 4294901760
      %v644 = vsub.f32 %v333, %v643
      %645 = vmatpush1.msra.mxu0 %v644
      %646 = vmatprep.subr.mxu0 0.0
      %v647 = vand.u32 %v334, 4294901760
      %v648 = vsub.f32 %v334, %v647
      %649 = vmatpush1.msra.mxu0 %v648
      %650 = vmatprep.subr.mxu0 0.0
      %v651 = vand.u32 %v335, 4294901760
      %v652 = vsub.f32 %v335, %v651
      %653 = vmatpush1.msra.mxu0 %v652
      %654 = vmatprep.subr.mxu0 0.0
      %v655 = vand.u32 %v336, 4294901760
      %v656 = vsub.f32 %v336, %v655
      %657 = vmatpush1.msra.mxu0 %v656
      %658 = vmatprep.subr.mxu0 0.0
      %v659 = vand.u32 %v337, 4294901760
      %v660 = vsub.f32 %v337, %v659
      %661 = vmatpush1.msra.mxu0 %v660
      %662 = vmatprep.subr.mxu0 0.0
      %663 = vmatpush1.msra.mxu0 0.0
      %664 = vmatprep.subr.mxu0 0.0
      %665 = vmatpush1.msra.mxu0 0.0
      %666 = vmatprep.subr.mxu0 0.0
      %667 = vmatpush1.msra.mxu0 0.0
      %668 = vmatprep.subr.mxu0 0.0
      %669 = vmatpush1.msra.mxu0 0.0
      %670 = vmatprep.subr.mxu0 0.0
      %671 = vmatpush1.msra.mxu0 0.0
      %672 = vmatprep.subr.mxu0 0.0
      %673 = vmatpush1.msra.mxu0 0.0
      %674 = vmatprep.subr.mxu0 0.0
      %675 = vmatpush1.msra.mxu0 0.0
      %676 = vmatprep.subr.mxu0 0.0
      %677 = vmatpush1.msra.mxu0 0.0
      %678 = vmatprep.subr.mxu0 0.0
      %679 = vmatpush1.msra.mxu0 0.0
      %680 = vmatprep.subr.mxu0 0.0
      %681 = vmatpush1.msra.mxu0 0.0
      %682 = vmatprep.subr.mxu0 0.0
      %683 = vmatpush1.msra.mxu0 0.0
      %684 = vmatprep.subr.mxu0 0.0
      %685 = vmatpush1.msra.mxu0 0.0
      %686 = vmatprep.subr.mxu0 0.0
      %687 = vmatpush1.msra.mxu0 0.0
      %688 = vmatprep.subr.mxu0 0.0
      %689 = vmatpush1.msra.mxu0 0.0
      %690 = vmatprep.subr.mxu0 0.0
      %691 = vmatpush1.msra.mxu0 0.0
      %692 = vmatprep.subr.mxu0 0.0
      %693 = vmatpush1.msra.mxu0 0.0
      %694 = vmatprep.mubr.f32.mxu0 0.0
      %v695 = vand.u32 %v338, 4294901760
      %v696 = vsub.f32 %v338, %v695
      %697 = vmatmul.mubr.f32.gmra.mrb[0].mxu0 %v696
      %v698 = vpop.f32.mrb[0].mxu0
      %v699 = vadd.f32 %v589, %v698
      %v700 = vpop.f32.mrb[0].mxu0
      %701 = vmatprep.mubr.f32.mxu0 0.0
      %v702 = vand.u32 %v339, 4294901760
      %v703 = vsub.f32 %v339, %v702
      %704 = vmatmul.mubr.f32.gmra.mrb[0].mxu0 %v703
      %v705 = vpop.f32.mrb[0].mxu0
      %v706 = vadd.f32 %v595, %v705
      %v707 = vpop.f32.mrb[0].mxu0
      %708 = vdwg.mxu0
      %709 = vmatprep.subr.mxu0 0.0
      %v710 = vand.u32 %v322, 4294901760
      %711 = vmatpush1.msra.mxu0 %v710
      %712 = vmatprep.subr.mxu0 0.0
      %v713 = vand.u32 %v323, 4294901760
      %714 = vmatpush1.msra.mxu0 %v713
      %715 = vmatprep.subr.mxu0 0.0
      %v716 = vand.u32 %v324, 4294901760
      %717 = vmatpush1.msra.mxu0 %v716
      %718 = vmatprep.subr.mxu0 0.0
      %v719 = vand.u32 %v325, 4294901760
      %720 = vmatpush1.msra.mxu0 %v719
      %721 = vmatprep.subr.mxu0 0.0
      %v722 = vand.u32 %v326, 4294901760
      %723 = vmatpush1.msra.mxu0 %v722
      %724 = vmatprep.subr.mxu0 0.0
      %v725 = vand.u32 %v327, 4294901760
      %726 = vmatpush1.msra.mxu0 %v725
      %727 = vmatprep.subr.mxu0 0.0
      %v728 = vand.u32 %v328, 4294901760
      %729 = vmatpush1.msra.mxu0 %v728
      %730 = vmatprep.subr.mxu0 0.0
      %v731 = vand.u32 %v329, 4294901760
      %732 = vmatpush1.msra.mxu0 %v731
      %733 = vmatprep.subr.mxu0 0.0
      %v734 = vand.u32 %v330, 4294901760
      %735 = vmatpush1.msra.mxu0 %v734
      %736 = vmatprep.subr.mxu0 0.0
      %v737 = vand.u32 %v331, 4294901760
      %738 = vmatpush1.msra.mxu0 %v737
      %739 = vmatprep.subr.mxu0 0.0
      %v740 = vand.u32 %v332, 4294901760
      %741 = vmatpush1.msra.mxu0 %v740
      %742 = vmatprep.subr.mxu0 0.0
      %v743 = vand.u32 %v333, 4294901760
      %744 = vmatpush1.msra.mxu0 %v743
      %745 = vmatprep.subr.mxu0 0.0
      %v746 = vand.u32 %v334, 4294901760
      %747 = vmatpush1.msra.mxu0 %v746
      %748 = vmatprep.subr.mxu0 0.0
      %v749 = vand.u32 %v335, 4294901760
      %750 = vmatpush1.msra.mxu0 %v749
      %751 = vmatprep.subr.mxu0 0.0
      %v752 = vand.u32 %v336, 4294901760
      %753 = vmatpush1.msra.mxu0 %v752
      %754 = vmatprep.subr.mxu0 0.0
      %v755 = vand.u32 %v337, 4294901760
      %756 = vmatpush1.msra.mxu0 %v755
      %757 = vmatprep.subr.mxu0 0.0
      %758 = vmatpush1.msra.mxu0 0.0
      %759 = vmatprep.subr.mxu0 0.0
      %760 = vmatpush1.msra.mxu0 0.0
      %761 = vmatprep.subr.mxu0 0.0
      %762 = vmatpush1.msra.mxu0 0.0
      %763 = vmatprep.subr.mxu0 0.0
      %764 = vmatpush1.msra.mxu0 0.0
      %765 = vmatprep.subr.mxu0 0.0
      %766 = vmatpush1.msra.mxu0 0.0
      %767 = vmatprep.subr.mxu0 0.0
      %768 = vmatpush1.msra.mxu0 0.0
      %769 = vmatprep.subr.mxu0 0.0
      %770 = vmatpush1.msra.mxu0 0.0
      %771 = vmatprep.subr.mxu0 0.0
      %772 = vmatpush1.msra.mxu0 0.0
      %773 = vmatprep.subr.mxu0 0.0
      %774 = vmatpush1.msra.mxu0 0.0
      %775 = vmatprep.subr.mxu0 0.0
      %776 = vmatpush1.msra.mxu0 0.0
      %777 = vmatprep.subr.mxu0 0.0
      %778 = vmatpush1.msra.mxu0 0.0
      %779 = vmatprep.subr.mxu0 0.0
      %780 = vmatpush1.msra.mxu0 0.0
      %781 = vmatprep.subr.mxu0 0.0
      %782 = vmatpush1.msra.mxu0 0.0
      %783 = vmatprep.subr.mxu0 0.0
      %784 = vmatpush1.msra.mxu0 0.0
      %785 = vmatprep.subr.mxu0 0.0
      %786 = vmatpush1.msra.mxu0 0.0
      %787 = vmatprep.subr.mxu0 0.0
      %788 = vmatpush1.msra.mxu0 0.0
      %789 = vmatprep.mubr.f32.mxu0 0.0
      %v790 = vand.u32 %v338, 4294901760
      %v791 = vsub.f32 %v338, %v790
      %v792 = vand.u32 %v791, 4294901760
      %793 = vmatmul.mubr.f32.gmra.mrb[0].mxu0 %v792
      %v794 = vpop.f32.mrb[0].mxu0
      %v795 = vadd.f32 %v699, %v794
      %v796 = vpop.f32.mrb[0].mxu0
      %797 = vmatprep.mubr.f32.mxu0 0.0
      %v798 = vand.u32 %v339, 4294901760
      %v799 = vsub.f32 %v339, %v798
      %v800 = vand.u32 %v799, 4294901760
      %801 = vmatmul.mubr.f32.gmra.mrb[0].mxu0 %v800
      %v802 = vpop.f32.mrb[0].mxu0
      %v803 = vadd.f32 %v706, %v802
      %v804 = vpop.f32.mrb[0].mxu0
      %805 = vdwg.mxu0
      %806 = vmatprep.subr.mxu0 0.0
      %v807 = vand.u32 %v322, 4294901760
      %v808 = vsub.f32 %v322, %v807
      %v809 = vand.u32 %v808, 4294901760
      %810 = vmatpush1.msra.mxu0 %v809
      %811 = vmatprep.subr.mxu0 0.0
      %v812 = vand.u32 %v323, 4294901760
      %v813 = vsub.f32 %v323, %v812
      %v814 = vand.u32 %v813, 4294901760
      %815 = vmatpush1.msra.mxu0 %v814
      %816 = vmatprep.subr.mxu0 0.0
      %v817 = vand.u32 %v324, 4294901760
      %v818 = vsub.f32 %v324, %v817
      %v819 = vand.u32 %v818, 4294901760
      %820 = vmatpush1.msra.mxu0 %v819
      %821 = vmatprep.subr.mxu0 0.0
      %v822 = vand.u32 %v325, 4294901760
      %v823 = vsub.f32 %v325, %v822
      %v824 = vand.u32 %v823, 4294901760
      %825 = vmatpush1.msra.mxu0 %v824
      %826 = vmatprep.subr.mxu0 0.0
      %v827 = vand.u32 %v326, 4294901760
      %v828 = vsub.f32 %v326, %v827
      %v829 = vand.u32 %v828, 4294901760
      %830 = vmatpush1.msra.mxu0 %v829
      %831 = vmatprep.subr.mxu0 0.0
      %v832 = vand.u32 %v327, 4294901760
      %v833 = vsub.f32 %v327, %v832
      %v834 = vand.u32 %v833, 4294901760
      %835 = vmatpush1.msra.mxu0 %v834
      %836 = vmatprep.subr.mxu0 0.0
      %v837 = vand.u32 %v328, 4294901760
      %v838 = vsub.f32 %v328, %v837
      %v839 = vand.u32 %v838, 4294901760
      %840 = vmatpush1.msra.mxu0 %v839
      %841 = vmatprep.subr.mxu0 0.0
      %v842 = vand.u32 %v329, 4294901760
      %v843 = vsub.f32 %v329, %v842
      %v844 = vand.u32 %v843, 4294901760
      %845 = vmatpush1.msra.mxu0 %v844
      %846 = vmatprep.subr.mxu0 0.0
      %v847 = vand.u32 %v330, 4294901760
      %v848 = vsub.f32 %v330, %v847
      %v849 = vand.u32 %v848, 4294901760
      %850 = vmatpush1.msra.mxu0 %v849
      %851 = vmatprep.subr.mxu0 0.0
      %v852 = vand.u32 %v331, 4294901760
      %v853 = vsub.f32 %v331, %v852
      %v854 = vand.u32 %v853, 4294901760
      %855 = vmatpush1.msra.mxu0 %v854
      %856 = vmatprep.subr.mxu0 0.0
      %v857 = vand.u32 %v332, 4294901760
      %v858 = vsub.f32 %v332, %v857
      %v859 = vand.u32 %v858, 4294901760
      %860 = vmatpush1.msra.mxu0 %v859
      %861 = vmatprep.subr.mxu0 0.0
      %v862 = vand.u32 %v333, 4294901760
      %v863 = vsub.f32 %v333, %v862
      %v864 = vand.u32 %v863, 4294901760
      %865 = vmatpush1.msra.mxu0 %v864
      %866 = vmatprep.subr.mxu0 0.0
      %v867 = vand.u32 %v334, 4294901760
      %v868 = vsub.f32 %v334, %v867
      %v869 = vand.u32 %v868, 4294901760
      %870 = vmatpush1.msra.mxu0 %v869
      %871 = vmatprep.subr.mxu0 0.0
      %v872 = vand.u32 %v335, 4294901760
      %v873 = vsub.f32 %v335, %v872
      %v874 = vand.u32 %v873, 4294901760
      %875 = vmatpush1.msra.mxu0 %v874
      %876 = vmatprep.subr.mxu0 0.0
      %v877 = vand.u32 %v336, 4294901760
      %v878 = vsub.f32 %v336, %v877
      %v879 = vand.u32 %v878, 4294901760
      %880 = vmatpush1.msra.mxu0 %v879
      %881 = vmatprep.subr.mxu0 0.0
      %v882 = vand.u32 %v337, 4294901760
      %v883 = vsub.f32 %v337, %v882
      %v884 = vand.u32 %v883, 4294901760
      %885 = vmatpush1.msra.mxu0 %v884
      %886 = vmatprep.subr.mxu0 0.0
      %887 = vmatpush1.msra.mxu0 0.0
      %888 = vmatprep.subr.mxu0 0.0
      %889 = vmatpush1.msra.mxu0 0.0
      %890 = vmatprep.subr.mxu0 0.0
      %891 = vmatpush1.msra.mxu0 0.0
      %892 = vmatprep.subr.mxu0 0.0
      %893 = vmatpush1.msra.mxu0 0.0
      %894 = vmatprep.subr.mxu0 0.0
      %895 = vmatpush1.msra.mxu0 0.0
      %896 = vmatprep.subr.mxu0 0.0
      %897 = vmatpush1.msra.mxu0 0.0
      %898 = vmatprep.subr.mxu0 0.0
      %899 = vmatpush1.msra.mxu0 0.0
      %900 = vmatprep.subr.mxu0 0.0
      %901 = vmatpush1.msra.mxu0 0.0
      %902 = vmatprep.subr.mxu0 0.0
      %903 = vmatpush1.msra.mxu0 0.0
      %904 = vmatprep.subr.mxu0 0.0
      %905 = vmatpush1.msra.mxu0 0.0
      %906 = vmatprep.subr.mxu0 0.0
      %907 = vmatpush1.msra.mxu0 0.0
      %908 = vmatprep.subr.mxu0 0.0
      %909 = vmatpush1.msra.mxu0 0.0
      %910 = vmatprep.subr.mxu0 0.0
      %911 = vmatpush1.msra.mxu0 0.0
      %912 = vmatprep.subr.mxu0 0.0
      %913 = vmatpush1.msra.mxu0 0.0
      %914 = vmatprep.subr.mxu0 0.0
      %915 = vmatpush1.msra.mxu0 0.0
      %916 = vmatprep.subr.mxu0 0.0
      %917 = vmatpush1.msra.mxu0 0.0
      %918 = vmatprep.mubr.f32.mxu0 0.0
      %v919 = vand.u32 %v338, 4294901760
      %920 = vmatmul.mubr.f32.gmra.mrb[0].mxu0 %v919
      %v921 = vpop.f32.mrb[0].mxu0
      %v922 = vadd.f32 %v795, %v921
      %v923 = vpop.f32.mrb[0].mxu0
      %924 = vmatprep.mubr.f32.mxu0 0.0
      %v925 = vand.u32 %v339, 4294901760
      %926 = vmatmul.mubr.f32.gmra.mrb[0].mxu0 %v925
      %v927 = vpop.f32.mrb[0].mxu0
      %v928 = vadd.f32 %v803, %v927
      %v929 = vpop.f32.mrb[0].mxu0
      %930 = vdwg.mxu0
      %931 = vmatprep.subr.mxu0 0.0
      %v932 = vand.u32 %v322, 4294901760
      %933 = vmatpush1.msra.mxu0 %v932
      %934 = vmatprep.subr.mxu0 0.0
      %v935 = vand.u32 %v323, 4294901760
      %936 = vmatpush1.msra.mxu0 %v935
      %937 = vmatprep.subr.mxu0 0.0
      %v938 = vand.u32 %v324, 4294901760
      %939 = vmatpush1.msra.mxu0 %v938
      %940 = vmatprep.subr.mxu0 0.0
      %v941 = vand.u32 %v325, 4294901760
      %942 = vmatpush1.msra.mxu0 %v941
      %943 = vmatprep.subr.mxu0 0.0
      %v944 = vand.u32 %v326, 4294901760
      %945 = vmatpush1.msra.mxu0 %v944
      %946 = vmatprep.subr.mxu0 0.0
      %v947 = vand.u32 %v327, 4294901760
      %948 = vmatpush1.msra.mxu0 %v947
      %949 = vmatprep.subr.mxu0 0.0
      %v950 = vand.u32 %v328, 4294901760
      %951 = vmatpush1.msra.mxu0 %v950
      %952 = vmatprep.subr.mxu0 0.0
      %v953 = vand.u32 %v329, 4294901760
      %954 = vmatpush1.msra.mxu0 %v953
      %955 = vmatprep.subr.mxu0 0.0
      %v956 = vand.u32 %v330, 4294901760
      %957 = vmatpush1.msra.mxu0 %v956
      %958 = vmatprep.subr.mxu0 0.0
      %v959 = vand.u32 %v331, 4294901760
      %960 = vmatpush1.msra.mxu0 %v959
      %961 = vmatprep.subr.mxu0 0.0
      %v962 = vand.u32 %v332, 4294901760
      %963 = vmatpush1.msra.mxu0 %v962
      %964 = vmatprep.subr.mxu0 0.0
      %v965 = vand.u32 %v333, 4294901760
      %966 = vmatpush1.msra.mxu0 %v965
      %967 = vmatprep.subr.mxu0 0.0
      %v968 = vand.u32 %v334, 4294901760
      %969 = vmatpush1.msra.mxu0 %v968
      %970 = vmatprep.subr.mxu0 0.0
      %v971 = vand.u32 %v335, 4294901760
      %972 = vmatpush1.msra.mxu0 %v971
      %973 = vmatprep.subr.mxu0 0.0
      %v974 = vand.u32 %v336, 4294901760
      %975 = vmatpush1.msra.mxu0 %v974
      %976 = vmatprep.subr.mxu0 0.0
      %v977 = vand.u32 %v337, 4294901760
      %978 = vmatpush1.msra.mxu0 %v977
      %979 = vmatprep.subr.mxu0 0.0
      %980 = vmatpush1.msra.mxu0 0.0
      %981 = vmatprep.subr.mxu0 0.0
      %982 = vmatpush1.msra.mxu0 0.0
      %983 = vmatprep.subr.mxu0 0.0
      %984 = vmatpush1.msra.mxu0 0.0
      %985 = vmatprep.subr.mxu0 0.0
      %986 = vmatpush1.msra.mxu0 0.0
      %987 = vmatprep.subr.mxu0 0.0
      %988 = vmatpush1.msra.mxu0 0.0
      %989 = vmatprep.subr.mxu0 0.0
      %990 = vmatpush1.msra.mxu0 0.0
      %991 = vmatprep.subr.mxu0 0.0
      %992 = vmatpush1.msra.mxu0 0.0
      %993 = vmatprep.subr.mxu0 0.0
      %994 = vmatpush1.msra.mxu0 0.0
      %995 = vmatprep.subr.mxu0 0.0
      %996 = vmatpush1.msra.mxu0 0.0
      %997 = vmatprep.subr.mxu0 0.0
      %998 = vmatpush1.msra.mxu0 0.0
      %999 = vmatprep.subr.mxu0 0.0
      %1000 = vmatpush1.msra.mxu0 0.0
      %1001 = vmatprep.subr.mxu0 0.0
      %1002 = vmatpush1.msra.mxu0 0.0
      %1003 = vmatprep.subr.mxu0 0.0
      %1004 = vmatpush1.msra.mxu0 0.0
      %1005 = vmatprep.subr.mxu0 0.0
      %1006 = vmatpush1.msra.mxu0 0.0
      %1007 = vmatprep.subr.mxu0 0.0
      %1008 = vmatpush1.msra.mxu0 0.0
      %1009 = vmatprep.subr.mxu0 0.0
      %1010 = vmatpush1.msra.mxu0 0.0
      %1011 = vmatprep.mubr.f32.mxu0 0.0
      %v1012 = vand.u32 %v338, 4294901760
      %1013 = vmatmul.mubr.f32.gmra.mrb[0].mxu0 %v1012
      %v1014 = vpop.f32.mrb[0].mxu0
      %v1015 = vadd.f32 %v922, %v1014
      %v1016 = vpop.f32.mrb[0].mxu0
      %1017 = vmatprep.mubr.f32.mxu0 0.0
      %v1018 = vand.u32 %v339, 4294901760
      %1019 = vmatmul.mubr.f32.gmra.mrb[0].mxu0 %v1018
      %v1020 = vpop.f32.mrb[0].mxu0
      %v1021 = vadd.f32 %v928, %v1020
      %v1022 = vpop.f32.mrb[0].mxu0
      %1023 = vdwg.mxu0
      %v1024 = vsel %vm282, %v1015, -inf
      %vm1025 = vcmask 519168
      %v1026 = vsel %vm1025, %v1021, -inf
      %v1027 = vmax.f32 %v1024, %v1026
      %v1028 = vrot.slane %v1027, 4
      %v1029 = vmax.f32 %v1027, %v1028
      %v1030 = vrot.slane %v1029, 2
      %v1031 = vmax.f32 %v1029, %v1030
      %v1032 = vrot.slane %v1031, 1
      %v1033 = vmax.f32 %v1031, %v1032
      %v1034 = vsub.f32 %v1015, %v1033
      %v1035 = vsub.f32 %v1021, %v1033
      %v1036 = vmul.f32 %v1034, 1.442695
      %v1037 = vpow.pop %v1036
      %v1038 = vmul.f32 %v1035, 1.442695
      %v1039 = vpow.pop %v1038
      %v1040 = vsel %vm282, %v1037, 0.0
      %v1041 = vsel %vm1025, %v1039, 0.0
      %v1042 = vadd.f32 %v1040, %v1041
      %v1043 = vrot.slane %v1042, 4
      %v1044 = vadd.f32 %v1042, %v1043
      %v1045 = vrot.slane %v1044, 2
      %v1046 = vadd.f32 %v1044, %v1045
      %v1047 = vrot.slane %v1046, 1
      %v1048 = vadd.f32 %v1046, %v1047
      %v1049 = vrcp.pop %v1048
      %v1050 = vmul.f32 %v1037, %v1049
      %v1051 = vmul.f32 %v1039, %v1049
      %1052 = vst.msk [vmem:[%s249] sm:$0xff] %vm282, %v1050
      %1053 = vst.msk [vmem:[%s249 + $0x8] sm:$0xf] %vm1025, %v1051
      %v1054 = vld [vmem:[%s2] sm:$0xff]
      %v1055 = vld [vmem:[%s2 + $0x8] sm:$0xff]
      %v1056 = vld [vmem:[%s2 + $0x10] sm:$0xff]
      %v1057 = vld [vmem:[%s2 + $0x18] sm:$0xff]
      %v1058 = vld [vmem:[%s2 + $0x20] sm:$0xff]
      %v1059 = vld [vmem:[%s2 + $0x28] sm:$0xff]
      %v1060 = vld [vmem:[%s2 + $0x30] sm:$0xff]
      %v1061 = vld [vmem:[%s2 + $0x38] sm:$0xff]
      %v1062 = vld [vmem:[%s2 + $0x40] sm:$0xff]
      %v1063 = vld [vmem:[%s2 + $0x48] sm:$0xff]
      %v1064 = vld [vmem:[%s2 + $0x50] sm:$0xff]
      %v1065 = vld [vmem:[%s2 + $0x58] sm:$0xff]
      %v1066 = vld [vmem:[%s2 + $0x60] sm:$0xff]
      %v1067 = vld [vmem:[%s2 + $0x68] sm:$0xff]
      %v1068 = vld [vmem:[%s2 + $0x70] sm:$0xff]
      %v1069 = vld [vmem:[%s2 + $0x78] sm:$0xff]
      %v1070 = vld [vmem:[%s2 + $0x80] sm:$0xff]
      %v1071 = vld [vmem:[%s2 + $0x88] sm:$0xff]
      %v1072 = vld [vmem:[%s2 + $0x90] sm:$0xff]
      %v1073 = vld [vmem:[%s2 + $0x98] sm:$0xff]
      %v1074 = vld [vmem:[%s2 + $0xa0] sm:$0xff]
      %v1075 = vld [vmem:[%s2 + $0xa8] sm:$0xff]
      %v1076 = vld [vmem:[%s2 + $0xb0] sm:$0xff]
      %v1077 = vld [vmem:[%s2 + $0xb8] sm:$0xff]
      %v1078 = vld [vmem:[%s2 + $0xc0] sm:$0xff]
      %v1079 = vld [vmem:[%s2 + $0xc8] sm:$0xff]
      %v1080 = vld [vmem:[%s2 + $0xd0] sm:$0xff]
      %v1081 = vld [vmem:[%s2 + $0xd8] sm:$0xff]
      %v1082 = vld [vmem:[%s2 + $0xe0] sm:$0xff]
      %v1083 = vld [vmem:[%s2 + $0xe8] sm:$0xff]
      %v1084 = vld [vmem:[%s2 + $0xf0] sm:$0xff]
      %v1085 = vld [vmem:[%s2 + $0xf8] sm:$0xff]
      %v1086 = vld [vmem:[%s2 + $0x100] sm:$0xff]
      %v1087 = vld [vmem:[%s2 + $0x108] sm:$0xff]
      %v1088 = vld [vmem:[%s2 + $0x110] sm:$0xff]
      %v1089 = vld [vmem:[%s2 + $0x118] sm:$0xff]
      %v1090 = vld [vmem:[%s2 + $0x120] sm:$0xff]
      %v1091 = vld [vmem:[%s2 + $0x128] sm:$0xff]
      %v1092 = vld [vmem:[%s2 + $0x130] sm:$0xff]
      %v1093 = vld [vmem:[%s2 + $0x138] sm:$0xff]
      %v1094 = vld [vmem:[%s2 + $0x140] sm:$0xff]
      %v1095 = vld [vmem:[%s2 + $0x148] sm:$0xff]
      %v1096 = vld [vmem:[%s2 + $0x150] sm:$0xff]
      %v1097 = vld [vmem:[%s2 + $0x158] sm:$0xff]
      %v1098 = vld [vmem:[%s2 + $0x160] sm:$0xff]
      %v1099 = vld [vmem:[%s2 + $0x168] sm:$0xff]
      %v1100 = vld [vmem:[%s2 + $0x170] sm:$0xff]
      %v1101 = vld [vmem:[%s2 + $0x178] sm:$0xff]
      %v1102 = vld [vmem:[%s2 + $0x180] sm:$0xff]
      %v1103 = vld [vmem:[%s2 + $0x188] sm:$0xff]
      %v1104 = vld [vmem:[%s2 + $0x190] sm:$0xff]
      %v1105 = vld [vmem:[%s2 + $0x198] sm:$0xff]
      %v1106 = vld [vmem:[%s2 + $0x1a0] sm:$0xff]
      %v1107 = vld [vmem:[%s2 + $0x1a8] sm:$0xff]
      %v1108 = vld [vmem:[%s2 + $0x1b0] sm:$0xff]
      %v1109 = vld [vmem:[%s2 + $0x1b8] sm:$0xff]
      %v1110 = vld [vmem:[%s2 + $0x1c0] sm:$0xff]
      %v1111 = vld [vmem:[%s2 + $0x1c8] sm:$0xff]
      %v1112 = vld [vmem:[%s2 + $0x1d0] sm:$0xff]
      %v1113 = vld [vmem:[%s2 + $0x1d8] sm:$0xff]
      %v1114 = vld [vmem:[%s2 + $0x1e0] sm:$0xff]
      %v1115 = vld [vmem:[%s2 + $0x1e8] sm:$0xff]
      %v1116 = vld [vmem:[%s2 + $0x1f0] sm:$0xff]
      %v1117 = vld [vmem:[%s2 + $0x1f8] sm:$0xff]
      %v1118 = vld [vmem:[%s2 + $0x200] sm:$0xff]
      %v1119 = vld [vmem:[%s2 + $0x208] sm:$0xff]
      %v1120 = vld [vmem:[%s2 + $0x210] sm:$0xff]
      %v1121 = vld [vmem:[%s2 + $0x218] sm:$0xff]
      %v1122 = vld [vmem:[%s2 + $0x220] sm:$0xff]
      %v1123 = vld [vmem:[%s2 + $0x228] sm:$0xff]
      %v1124 = vld [vmem:[%s2 + $0x230] sm:$0xff]
      %v1125 = vld [vmem:[%s2 + $0x238] sm:$0xff]
      %v1126 = vld [vmem:[%s2 + $0x240] sm:$0xff]
      %v1127 = vld [vmem:[%s2 + $0x248] sm:$0xff]
      %v1128 = vld [vmem:[%s2 + $0x250] sm:$0xff]
      %v1129 = vld [vmem:[%s2 + $0x258] sm:$0xff]
      %v1130 = vld [vmem:[%s2 + $0x260] sm:$0xff]
      %v1131 = vld [vmem:[%s2 + $0x268] sm:$0xff]
      %v1132 = vld [vmem:[%s2 + $0x270] sm:$0xff]
      %v1133 = vld [vmem:[%s2 + $0x278] sm:$0xff]
      %v1134 = vld [vmem:[%s2 + $0x280] sm:$0xff]
      %v1135 = vld [vmem:[%s2 + $0x288] sm:$0xff]
      %v1136 = vld [vmem:[%s2 + $0x290] sm:$0xff]
      %v1137 = vld [vmem:[%s2 + $0x298] sm:$0xff]
      %v1138 = vld [vmem:[%s2 + $0x2a0] sm:$0xff]
      %v1139 = vld [vmem:[%s2 + $0x2a8] sm:$0xff]
      %v1140 = vld [vmem:[%s2 + $0x2b0] sm:$0xff]
      %v1141 = vld [vmem:[%s2 + $0x2b8] sm:$0xff]
      %v1142 = vld [vmem:[%s2 + $0x2c0] sm:$0xff]
      %v1143 = vld [vmem:[%s2 + $0x2c8] sm:$0xff]
      %v1144 = vld [vmem:[%s2 + $0x2d0] sm:$0xff]
      %v1145 = vld [vmem:[%s2 + $0x2d8] sm:$0xff]
      %v1146 = vld [vmem:[%s2 + $0x2e0] sm:$0xff]
      %v1147 = vld [vmem:[%s2 + $0x2e8] sm:$0xff]
      %v1148 = vld [vmem:[%s2 + $0x2f0] sm:$0xff]
      %v1149 = vld [vmem:[%s2 + $0x2f8] sm:$0xff]
      %v1150 = vld [vmem:[%s2 + $0x300] sm:$0xff]
      %v1151 = vld [vmem:[%s2 + $0x308] sm:$0xff]
      %v1152 = vld [vmem:[%s2 + $0x310] sm:$0xff]
      %v1153 = vld [vmem:[%s2 + $0x318] sm:$0xff]
      %v1154 = vld [vmem:[%s2 + $0x320] sm:$0xff]
      %v1155 = vld [vmem:[%s2 + $0x328] sm:$0xff]
      %v1156 = vld [vmem:[%s2 + $0x330] sm:$0xff]
      %v1157 = vld [vmem:[%s2 + $0x338] sm:$0xff]
      %v1158 = vld [vmem:[%s2 + $0x340] sm:$0xff]
      %v1159 = vld [vmem:[%s2 + $0x348] sm:$0xff]
      %v1160 = vld [vmem:[%s2 + $0x350] sm:$0xff]
      %v1161 = vld [vmem:[%s2 + $0x358] sm:$0xff]
      %v1162 = vld [vmem:[%s2 + $0x360] sm:$0xff]
      %v1163 = vld [vmem:[%s2 + $0x368] sm:$0xff]
      %v1164 = vld [vmem:[%s2 + $0x370] sm:$0xff]
      %v1165 = vld [vmem:[%s2 + $0x378] sm:$0xff]
      %v1166 = vld [vmem:[%s2 + $0x380] sm:$0xff]
      %v1167 = vld [vmem:[%s2 + $0x388] sm:$0xff]
      %v1168 = vld [vmem:[%s2 + $0x390] sm:$0xff]
      %v1169 = vld [vmem:[%s2 + $0x398] sm:$0xff]
      %v1170 = vld [vmem:[%s2 + $0x3a0] sm:$0xff]
      %v1171 = vld [vmem:[%s2 + $0x3a8] sm:$0xff]
      %v1172 = vld [vmem:[%s2 + $0x3b0] sm:$0xff]
      %v1173 = vld [vmem:[%s2 + $0x3b8] sm:$0xff]
      %v1174 = vld [vmem:[%s2 + $0x3c0] sm:$0xff]
      %v1175 = vld [vmem:[%s2 + $0x3c8] sm:$0xff]
      %v1176 = vld [vmem:[%s2 + $0x3d0] sm:$0xff]
      %v1177 = vld [vmem:[%s2 + $0x3d8] sm:$0xff]
      %v1178 = vld [vmem:[%s2 + $0x3e0] sm:$0xff]
      %v1179 = vld [vmem:[%s2 + $0x3e8] sm:$0xff]
      %v1180 = vld [vmem:[%s2 + $0x3f0] sm:$0xff]
      %v1181 = vld [vmem:[%s2 + $0x3f8] sm:$0xff]
      %1183 = vset.pattern.permute.xlu0 0
      %1184 = vperm.xlu0 %1183, %v1054
      %v1185 = vpop.permute.xlu0 %1184
      %1188 = vset.pattern.permute.xlu0 0
      %1189 = vperm.xlu0 %1188, %v1055
      %v1190 = vpop.permute.xlu0 %1189
      %1193 = vset.pattern.permute.xlu0 0
      %1194 = vperm.xlu0 %1193, %v1056
      %v1195 = vpop.permute.xlu0 %1194
      %1198 = vset.pattern.permute.xlu0 0
      %1199 = vperm.xlu0 %1198, %v1057
      %v1200 = vpop.permute.xlu0 %1199
      %1203 = vset.pattern.permute.xlu0 0
      %1204 = vperm.xlu0 %1203, %v1058
      %v1205 = vpop.permute.xlu0 %1204
      %1208 = vset.pattern.permute.xlu0 0
      %1209 = vperm.xlu0 %1208, %v1059
      %v1210 = vpop.permute.xlu0 %1209
      %1213 = vset.pattern.permute.xlu0 0
      %1214 = vperm.xlu0 %1213, %v1060
      %v1215 = vpop.permute.xlu0 %1214
      %1218 = vset.pattern.permute.xlu0 0
      %1219 = vperm.xlu0 %1218, %v1061
      %v1220 = vpop.permute.xlu0 %1219
      %1223 = vset.pattern.permute.xlu0 0
      %1224 = vperm.xlu0 %1223, %v1062
      %v1225 = vpop.permute.xlu0 %1224
      %1228 = vset.pattern.permute.xlu0 0
      %1229 = vperm.xlu0 %1228, %v1063
      %v1230 = vpop.permute.xlu0 %1229
      %1233 = vset.pattern.permute.xlu0 0
      %1234 = vperm.xlu0 %1233, %v1064
      %v1235 = vpop.permute.xlu0 %1234
      %1238 = vset.pattern.permute.xlu0 0
      %1239 = vperm.xlu0 %1238, %v1065
      %v1240 = vpop.permute.xlu0 %1239
      %1243 = vset.pattern.permute.xlu0 0
      %1244 = vperm.xlu0 %1243, %v1066
      %v1245 = vpop.permute.xlu0 %1244
      %1248 = vset.pattern.permute.xlu0 0
      %1249 = vperm.xlu0 %1248, %v1067
      %v1250 = vpop.permute.xlu0 %1249
      %1253 = vset.pattern.permute.xlu0 0
      %1254 = vperm.xlu0 %1253, %v1068
      %v1255 = vpop.permute.xlu0 %1254
      %1258 = vset.pattern.permute.xlu0 0
      %1259 = vperm.xlu0 %1258, %v1069
      %v1260 = vpop.permute.xlu0 %1259
      %v1262 = vsub.f32 %v322, %v1185
      %v1263 = vsub.f32 %v323, %v1190
      %v1264 = vsub.f32 %v324, %v1195
      %v1265 = vsub.f32 %v325, %v1200
      %v1266 = vsub.f32 %v326, %v1205
      %v1267 = vsub.f32 %v327, %v1210
      %v1268 = vsub.f32 %v328, %v1215
      %v1269 = vsub.f32 %v329, %v1220
      %v1270 = vsub.f32 %v330, %v1225
      %v1271 = vsub.f32 %v331, %v1230
      %v1272 = vsub.f32 %v332, %v1235
      %v1273 = vsub.f32 %v333, %v1240
      %v1274 = vsub.f32 %v334, %v1245
      %v1275 = vsub.f32 %v335, %v1250
      %v1276 = vsub.f32 %v336, %v1255
      %v1277 = vsub.f32 %v337, %v1260
      %v1278 = vlaneseq
      %v1279 = vshrl.u32 %v1278, 7
      %v1280 = vsub.s32 0, %v1279
      %v1281 = vrot.slane %v1050, %v1280
      %v1282 = vmul.f32 %v1262, %v1281
      %v1283 = vmul.f32 %v1263, %v1281
      %v1284 = vmul.f32 %v1264, %v1281
      %v1285 = vmul.f32 %v1265, %v1281
      %v1286 = vmul.f32 %v1266, %v1281
      %v1287 = vmul.f32 %v1267, %v1281
      %v1288 = vmul.f32 %v1268, %v1281
      %v1289 = vmul.f32 %v1269, %v1281
      %v1290 = vmul.f32 %v1270, %v1281
      %v1291 = vmul.f32 %v1271, %v1281
      %v1292 = vmul.f32 %v1272, %v1281
      %v1293 = vmul.f32 %v1273, %v1281
      %v1294 = vmul.f32 %v1274, %v1281
      %v1295 = vmul.f32 %v1275, %v1281
      %v1296 = vmul.f32 %v1276, %v1281
      %v1297 = vmul.f32 %v1277, %v1281
      %1298 = vst.msk [vmem:[%s241] sm:$0xff] %vm282, %v1282
      %1299 = vst.msk [vmem:[%s241 + $0x8] sm:$0xff] %vm282, %v1283
      %1300 = vst.msk [vmem:[%s241 + $0x10] sm:$0xff] %vm282, %v1284
      %1301 = vst.msk [vmem:[%s241 + $0x18] sm:$0xff] %vm282, %v1285
      %1302 = vst.msk [vmem:[%s241 + $0x20] sm:$0xff] %vm282, %v1286
      %1303 = vst.msk [vmem:[%s241 + $0x28] sm:$0xff] %vm282, %v1287
      %1304 = vst.msk [vmem:[%s241 + $0x30] sm:$0xff] %vm282, %v1288
      %1305 = vst.msk [vmem:[%s241 + $0x38] sm:$0xff] %vm282, %v1289
      %1306 = vst.msk [vmem:[%s241 + $0x40] sm:$0xff] %vm282, %v1290
      %1307 = vst.msk [vmem:[%s241 + $0x48] sm:$0xff] %vm282, %v1291
      %1308 = vst.msk [vmem:[%s241 + $0x50] sm:$0xff] %vm282, %v1292
      %1309 = vst.msk [vmem:[%s241 + $0x58] sm:$0xff] %vm282, %v1293
      %1310 = vst.msk [vmem:[%s241 + $0x60] sm:$0xff] %vm282, %v1294
      %1311 = vst.msk [vmem:[%s241 + $0x68] sm:$0xff] %vm282, %v1295
      %1312 = vst.msk [vmem:[%s241 + $0x70] sm:$0xff] %vm282, %v1296
      %1313 = vst.msk [vmem:[%s241 + $0x78] sm:$0xff] %vm282, %v1297
      %1315 = vset.pattern.permute.xlu0 0
      %1316 = vperm.xlu0 %1315, %v1070
      %v1317 = vpop.permute.xlu0 %1316
      %1320 = vset.pattern.permute.xlu0 0
      %1321 = vperm.xlu0 %1320, %v1071
      %v1322 = vpop.permute.xlu0 %1321
      %1325 = vset.pattern.permute.xlu0 0
      %1326 = vperm.xlu0 %1325, %v1072
      %v1327 = vpop.permute.xlu0 %1326
      %1330 = vset.pattern.permute.xlu0 0
      %1331 = vperm.xlu0 %1330, %v1073
      %v1332 = vpop.permute.xlu0 %1331
      %1335 = vset.pattern.permute.xlu0 0
      %1336 = vperm.xlu0 %1335, %v1074
      %v1337 = vpop.permute.xlu0 %1336
      %1340 = vset.pattern.permute.xlu0 0
      %1341 = vperm.xlu0 %1340, %v1075
      %v1342 = vpop.permute.xlu0 %1341
      %1345 = vset.pattern.permute.xlu0 0
      %1346 = vperm.xlu0 %1345, %v1076
      %v1347 = vpop.permute.xlu0 %1346
      %1350 = vset.pattern.permute.xlu0 0
      %1351 = vperm.xlu0 %1350, %v1077
      %v1352 = vpop.permute.xlu0 %1351
      %1355 = vset.pattern.permute.xlu0 0
      %1356 = vperm.xlu0 %1355, %v1078
      %v1357 = vpop.permute.xlu0 %1356
      %1360 = vset.pattern.permute.xlu0 0
      %1361 = vperm.xlu0 %1360, %v1079
      %v1362 = vpop.permute.xlu0 %1361
      %1365 = vset.pattern.permute.xlu0 0
      %1366 = vperm.xlu0 %1365, %v1080
      %v1367 = vpop.permute.xlu0 %1366
      %1370 = vset.pattern.permute.xlu0 0
      %1371 = vperm.xlu0 %1370, %v1081
      %v1372 = vpop.permute.xlu0 %1371
      %1375 = vset.pattern.permute.xlu0 0
      %1376 = vperm.xlu0 %1375, %v1082
      %v1377 = vpop.permute.xlu0 %1376
      %1380 = vset.pattern.permute.xlu0 0
      %1381 = vperm.xlu0 %1380, %v1083
      %v1382 = vpop.permute.xlu0 %1381
      %1385 = vset.pattern.permute.xlu0 0
      %1386 = vperm.xlu0 %1385, %v1084
      %v1387 = vpop.permute.xlu0 %1386
      %1390 = vset.pattern.permute.xlu0 0
      %1391 = vperm.xlu0 %1390, %v1085
      %v1392 = vpop.permute.xlu0 %1391
      %v1394 = vsub.f32 %v322, %v1317
      %v1395 = vsub.f32 %v323, %v1322
      %v1396 = vsub.f32 %v324, %v1327
      %v1397 = vsub.f32 %v325, %v1332
      %v1398 = vsub.f32 %v326, %v1337
      %v1399 = vsub.f32 %v327, %v1342
      %v1400 = vsub.f32 %v328, %v1347
      %v1401 = vsub.f32 %v329, %v1352
      %v1402 = vsub.f32 %v330, %v1357
      %v1403 = vsub.f32 %v331, %v1362
      %v1404 = vsub.f32 %v332, %v1367
      %v1405 = vsub.f32 %v333, %v1372
      %v1406 = vsub.f32 %v334, %v1377
      %v1407 = vsub.f32 %v335, %v1382
      %v1408 = vsub.f32 %v336, %v1387
      %v1409 = vsub.f32 %v337, %v1392
      %v1410 = vlaneseq
      %v1411 = vshrl.u32 %v1410, 7
      %v1412 = vsub.s32 1, %v1411
      %v1413 = vrot.slane %v1050, %v1412
      %v1414 = vmul.f32 %v1394, %v1413
      %v1415 = vmul.f32 %v1395, %v1413
      %v1416 = vmul.f32 %v1396, %v1413
      %v1417 = vmul.f32 %v1397, %v1413
      %v1418 = vmul.f32 %v1398, %v1413
      %v1419 = vmul.f32 %v1399, %v1413
      %v1420 = vmul.f32 %v1400, %v1413
      %v1421 = vmul.f32 %v1401, %v1413
      %v1422 = vmul.f32 %v1402, %v1413
      %v1423 = vmul.f32 %v1403, %v1413
      %v1424 = vmul.f32 %v1404, %v1413
      %v1425 = vmul.f32 %v1405, %v1413
      %v1426 = vmul.f32 %v1406, %v1413
      %v1427 = vmul.f32 %v1407, %v1413
      %v1428 = vmul.f32 %v1408, %v1413
      %v1429 = vmul.f32 %v1409, %v1413
      %s1430 = scalar_lea.vmem %s241, 128
      %1431 = vst.msk [vmem:[%s1430] sm:$0xff] %vm282, %v1414
      %1432 = vst.msk [vmem:[%s1430 + $0x8] sm:$0xff] %vm282, %v1415
      %1433 = vst.msk [vmem:[%s1430 + $0x10] sm:$0xff] %vm282, %v1416
      %1434 = vst.msk [vmem:[%s1430 + $0x18] sm:$0xff] %vm282, %v1417
      %1435 = vst.msk [vmem:[%s1430 + $0x20] sm:$0xff] %vm282, %v1418
      %1436 = vst.msk [vmem:[%s1430 + $0x28] sm:$0xff] %vm282, %v1419
      %1437 = vst.msk [vmem:[%s1430 + $0x30] sm:$0xff] %vm282, %v1420
      %1438 = vst.msk [vmem:[%s1430 + $0x38] sm:$0xff] %vm282, %v1421
      %1439 = vst.msk [vmem:[%s1430 + $0x40] sm:$0xff] %vm282, %v1422
      %1440 = vst.msk [vmem:[%s1430 + $0x48] sm:$0xff] %vm282, %v1423
      %1441 = vst.msk [vmem:[%s1430 + $0x50] sm:$0xff] %vm282, %v1424
      %1442 = vst.msk [vmem:[%s1430 + $0x58] sm:$0xff] %vm282, %v1425
      %1443 = vst.msk [vmem:[%s1430 + $0x60] sm:$0xff] %vm282, %v1426
      %1444 = vst.msk [vmem:[%s1430 + $0x68] sm:$0xff] %vm282, %v1427
      %1445 = vst.msk [vmem:[%s1430 + $0x70] sm:$0xff] %vm282, %v1428
      %1446 = vst.msk [vmem:[%s1430 + $0x78] sm:$0xff] %vm282, %v1429
      %1448 = vset.pattern.permute.xlu0 0
      %1449 = vperm.xlu0 %1448, %v1086
      %v1450 = vpop.permute.xlu0 %1449
      %1453 = vset.pattern.permute.xlu0 0
      %1454 = vperm.xlu0 %1453, %v1087
      %v1455 = vpop.permute.xlu0 %1454
      %1458 = vset.pattern.permute.xlu0 0
      %1459 = vperm.xlu0 %1458, %v1088
      %v1460 = vpop.permute.xlu0 %1459
      %1463 = vset.pattern.permute.xlu0 0
      %1464 = vperm.xlu0 %1463, %v1089
      %v1465 = vpop.permute.xlu0 %1464
      %1468 = vset.pattern.permute.xlu0 0
      %1469 = vperm.xlu0 %1468, %v1090
      %v1470 = vpop.permute.xlu0 %1469
      %1473 = vset.pattern.permute.xlu0 0
      %1474 = vperm.xlu0 %1473, %v1091
      %v1475 = vpop.permute.xlu0 %1474
      %1478 = vset.pattern.permute.xlu0 0
      %1479 = vperm.xlu0 %1478, %v1092
      %v1480 = vpop.permute.xlu0 %1479
      %1483 = vset.pattern.permute.xlu0 0
      %1484 = vperm.xlu0 %1483, %v1093
      %v1485 = vpop.permute.xlu0 %1484
      %1488 = vset.pattern.permute.xlu0 0
      %1489 = vperm.xlu0 %1488, %v1094
      %v1490 = vpop.permute.xlu0 %1489
      %1493 = vset.pattern.permute.xlu0 0
      %1494 = vperm.xlu0 %1493, %v1095
      %v1495 = vpop.permute.xlu0 %1494
      %1498 = vset.pattern.permute.xlu0 0
      %1499 = vperm.xlu0 %1498, %v1096
      %v1500 = vpop.permute.xlu0 %1499
      %1503 = vset.pattern.permute.xlu0 0
      %1504 = vperm.xlu0 %1503, %v1097
      %v1505 = vpop.permute.xlu0 %1504
      %1508 = vset.pattern.permute.xlu0 0
      %1509 = vperm.xlu0 %1508, %v1098
      %v1510 = vpop.permute.xlu0 %1509
      %1513 = vset.pattern.permute.xlu0 0
      %1514 = vperm.xlu0 %1513, %v1099
      %v1515 = vpop.permute.xlu0 %1514
      %1518 = vset.pattern.permute.xlu0 0
      %1519 = vperm.xlu0 %1518, %v1100
      %v1520 = vpop.permute.xlu0 %1519
      %1523 = vset.pattern.permute.xlu0 0
      %1524 = vperm.xlu0 %1523, %v1101
      %v1525 = vpop.permute.xlu0 %1524
      %v1527 = vsub.f32 %v322, %v1450
      %v1528 = vsub.f32 %v323, %v1455
      %v1529 = vsub.f32 %v324, %v1460
      %v1530 = vsub.f32 %v325, %v1465
      %v1531 = vsub.f32 %v326, %v1470
      %v1532 = vsub.f32 %v327, %v1475
      %v1533 = vsub.f32 %v328, %v1480
      %v1534 = vsub.f32 %v329, %v1485
      %v1535 = vsub.f32 %v330, %v1490
      %v1536 = vsub.f32 %v331, %v1495
      %v1537 = vsub.f32 %v332, %v1500
      %v1538 = vsub.f32 %v333, %v1505
      %v1539 = vsub.f32 %v334, %v1510
      %v1540 = vsub.f32 %v335, %v1515
      %v1541 = vsub.f32 %v336, %v1520
      %v1542 = vsub.f32 %v337, %v1525
      %v1543 = vlaneseq
      %v1544 = vshrl.u32 %v1543, 7
      %v1545 = vsub.s32 2, %v1544
      %v1546 = vrot.slane %v1050, %v1545
      %v1547 = vmul.f32 %v1527, %v1546
      %v1548 = vmul.f32 %v1528, %v1546
      %v1549 = vmul.f32 %v1529, %v1546
      %v1550 = vmul.f32 %v1530, %v1546
      %v1551 = vmul.f32 %v1531, %v1546
      %v1552 = vmul.f32 %v1532, %v1546
      %v1553 = vmul.f32 %v1533, %v1546
      %v1554 = vmul.f32 %v1534, %v1546
      %v1555 = vmul.f32 %v1535, %v1546
      %v1556 = vmul.f32 %v1536, %v1546
      %v1557 = vmul.f32 %v1537, %v1546
      %v1558 = vmul.f32 %v1538, %v1546
      %v1559 = vmul.f32 %v1539, %v1546
      %v1560 = vmul.f32 %v1540, %v1546
      %v1561 = vmul.f32 %v1541, %v1546
      %v1562 = vmul.f32 %v1542, %v1546
      %s1563 = scalar_lea.vmem %s241, 256
      %1564 = vst.msk [vmem:[%s1563] sm:$0xff] %vm282, %v1547
      %1565 = vst.msk [vmem:[%s1563 + $0x8] sm:$0xff] %vm282, %v1548
      %1566 = vst.msk [vmem:[%s1563 + $0x10] sm:$0xff] %vm282, %v1549
      %1567 = vst.msk [vmem:[%s1563 + $0x18] sm:$0xff] %vm282, %v1550
      %1568 = vst.msk [vmem:[%s1563 + $0x20] sm:$0xff] %vm282, %v1551
      %1569 = vst.msk [vmem:[%s1563 + $0x28] sm:$0xff] %vm282, %v1552
      %1570 = vst.msk [vmem:[%s1563 + $0x30] sm:$0xff] %vm282, %v1553
      %1571 = vst.msk [vmem:[%s1563 + $0x38] sm:$0xff] %vm282, %v1554
      %1572 = vst.msk [vmem:[%s1563 + $0x40] sm:$0xff] %vm282, %v1555
      %1573 = vst.msk [vmem:[%s1563 + $0x48] sm:$0xff] %vm282, %v1556
      %1574 = vst.msk [vmem:[%s1563 + $0x50] sm:$0xff] %vm282, %v1557
      %1575 = vst.msk [vmem:[%s1563 + $0x58] sm:$0xff] %vm282, %v1558
      %1576 = vst.msk [vmem:[%s1563 + $0x60] sm:$0xff] %vm282, %v1559
      %1577 = vst.msk [vmem:[%s1563 + $0x68] sm:$0xff] %vm282, %v1560
      %1578 = vst.msk [vmem:[%s1563 + $0x70] sm:$0xff] %vm282, %v1561
      %1579 = vst.msk [vmem:[%s1563 + $0x78] sm:$0xff] %vm282, %v1562
      %1581 = vset.pattern.permute.xlu0 0
      %1582 = vperm.xlu0 %1581, %v1102
      %v1583 = vpop.permute.xlu0 %1582
      %1586 = vset.pattern.permute.xlu0 0
      %1587 = vperm.xlu0 %1586, %v1103
      %v1588 = vpop.permute.xlu0 %1587
      %1591 = vset.pattern.permute.xlu0 0
      %1592 = vperm.xlu0 %1591, %v1104
      %v1593 = vpop.permute.xlu0 %1592
      %1596 = vset.pattern.permute.xlu0 0
      %1597 = vperm.xlu0 %1596, %v1105
      %v1598 = vpop.permute.xlu0 %1597
      %1601 = vset.pattern.permute.xlu0 0
      %1602 = vperm.xlu0 %1601, %v1106
      %v1603 = vpop.permute.xlu0 %1602
      %1606 = vset.pattern.permute.xlu0 0
      %1607 = vperm.xlu0 %1606, %v1107
      %v1608 = vpop.permute.xlu0 %1607
      %1611 = vset.pattern.permute.xlu0 0
      %1612 = vperm.xlu0 %1611, %v1108
      %v1613 = vpop.permute.xlu0 %1612
      %1616 = vset.pattern.permute.xlu0 0
      %1617 = vperm.xlu0 %1616, %v1109
      %v1618 = vpop.permute.xlu0 %1617
      %1621 = vset.pattern.permute.xlu0 0
      %1622 = vperm.xlu0 %1621, %v1110
      %v1623 = vpop.permute.xlu0 %1622
      %1626 = vset.pattern.permute.xlu0 0
      %1627 = vperm.xlu0 %1626, %v1111
      %v1628 = vpop.permute.xlu0 %1627
      %1631 = vset.pattern.permute.xlu0 0
      %1632 = vperm.xlu0 %1631, %v1112
      %v1633 = vpop.permute.xlu0 %1632
      %1636 = vset.pattern.permute.xlu0 0
      %1637 = vperm.xlu0 %1636, %v1113
      %v1638 = vpop.permute.xlu0 %1637
      %1641 = vset.pattern.permute.xlu0 0
      %1642 = vperm.xlu0 %1641, %v1114
      %v1643 = vpop.permute.xlu0 %1642
      %1646 = vset.pattern.permute.xlu0 0
      %1647 = vperm.xlu0 %1646, %v1115
      %v1648 = vpop.permute.xlu0 %1647
      %1651 = vset.pattern.permute.xlu0 0
      %1652 = vperm.xlu0 %1651, %v1116
      %v1653 = vpop.permute.xlu0 %1652
      %1656 = vset.pattern.permute.xlu0 0
      %1657 = vperm.xlu0 %1656, %v1117
      %v1658 = vpop.permute.xlu0 %1657
      %v1660 = vsub.f32 %v322, %v1583
      %v1661 = vsub.f32 %v323, %v1588
      %v1662 = vsub.f32 %v324, %v1593
      %v1663 = vsub.f32 %v325, %v1598
      %v1664 = vsub.f32 %v326, %v1603
      %v1665 = vsub.f32 %v327, %v1608
      %v1666 = vsub.f32 %v328, %v1613
      %v1667 = vsub.f32 %v329, %v1618
      %v1668 = vsub.f32 %v330, %v1623
      %v1669 = vsub.f32 %v331, %v1628
      %v1670 = vsub.f32 %v332, %v1633
      %v1671 = vsub.f32 %v333, %v1638
      %v1672 = vsub.f32 %v334, %v1643
      %v1673 = vsub.f32 %v335, %v1648
      %v1674 = vsub.f32 %v336, %v1653
      %v1675 = vsub.f32 %v337, %v1658
      %v1676 = vlaneseq
      %v1677 = vshrl.u32 %v1676, 7
      %v1678 = vsub.s32 3, %v1677
      %v1679 = vrot.slane %v1050, %v1678
      %v1680 = vmul.f32 %v1660, %v1679
      %v1681 = vmul.f32 %v1661, %v1679
      %v1682 = vmul.f32 %v1662, %v1679
      %v1683 = vmul.f32 %v1663, %v1679
      %v1684 = vmul.f32 %v1664, %v1679
      %v1685 = vmul.f32 %v1665, %v1679
      %v1686 = vmul.f32 %v1666, %v1679
      %v1687 = vmul.f32 %v1667, %v1679
      %v1688 = vmul.f32 %v1668, %v1679
      %v1689 = vmul.f32 %v1669, %v1679
      %v1690 = vmul.f32 %v1670, %v1679
      %v1691 = vmul.f32 %v1671, %v1679
      %v1692 = vmul.f32 %v1672, %v1679
      %v1693 = vmul.f32 %v1673, %v1679
      %v1694 = vmul.f32 %v1674, %v1679
      %v1695 = vmul.f32 %v1675, %v1679
      %s1696 = scalar_lea.vmem %s241, 384
      %1697 = vst.msk [vmem:[%s1696] sm:$0xff] %vm282, %v1680
      %1698 = vst.msk [vmem:[%s1696 + $0x8] sm:$0xff] %vm282, %v1681
      %1699 = vst.msk [vmem:[%s1696 + $0x10] sm:$0xff] %vm282, %v1682
      %1700 = vst.msk [vmem:[%s1696 + $0x18] sm:$0xff] %vm282, %v1683
      %1701 = vst.msk [vmem:[%s1696 + $0x20] sm:$0xff] %vm282, %v1684
      %1702 = vst.msk [vmem:[%s1696 + $0x28] sm:$0xff] %vm282, %v1685
      %1703 = vst.msk [vmem:[%s1696 + $0x30] sm:$0xff] %vm282, %v1686
      %1704 = vst.msk [vmem:[%s1696 + $0x38] sm:$0xff] %vm282, %v1687
      %1705 = vst.msk [vmem:[%s1696 + $0x40] sm:$0xff] %vm282, %v1688
      %1706 = vst.msk [vmem:[%s1696 + $0x48] sm:$0xff] %vm282, %v1689
      %1707 = vst.msk [vmem:[%s1696 + $0x50] sm:$0xff] %vm282, %v1690
      %1708 = vst.msk [vmem:[%s1696 + $0x58] sm:$0xff] %vm282, %v1691
      %1709 = vst.msk [vmem:[%s1696 + $0x60] sm:$0xff] %vm282, %v1692
      %1710 = vst.msk [vmem:[%s1696 + $0x68] sm:$0xff] %vm282, %v1693
      %1711 = vst.msk [vmem:[%s1696 + $0x70] sm:$0xff] %vm282, %v1694
      %1712 = vst.msk [vmem:[%s1696 + $0x78] sm:$0xff] %vm282, %v1695
      %1714 = vset.pattern.permute.xlu0 0
      %1715 = vperm.xlu0 %1714, %v1118
      %v1716 = vpop.permute.xlu0 %1715
      %1719 = vset.pattern.permute.xlu0 0
      %1720 = vperm.xlu0 %1719, %v1119
      %v1721 = vpop.permute.xlu0 %1720
      %1724 = vset.pattern.permute.xlu0 0
      %1725 = vperm.xlu0 %1724, %v1120
      %v1726 = vpop.permute.xlu0 %1725
      %1729 = vset.pattern.permute.xlu0 0
      %1730 = vperm.xlu0 %1729, %v1121
      %v1731 = vpop.permute.xlu0 %1730
      %1734 = vset.pattern.permute.xlu0 0
      %1735 = vperm.xlu0 %1734, %v1122
      %v1736 = vpop.permute.xlu0 %1735
      %1739 = vset.pattern.permute.xlu0 0
      %1740 = vperm.xlu0 %1739, %v1123
      %v1741 = vpop.permute.xlu0 %1740
      %1744 = vset.pattern.permute.xlu0 0
      %1745 = vperm.xlu0 %1744, %v1124
      %v1746 = vpop.permute.xlu0 %1745
      %1749 = vset.pattern.permute.xlu0 0
      %1750 = vperm.xlu0 %1749, %v1125
      %v1751 = vpop.permute.xlu0 %1750
      %1754 = vset.pattern.permute.xlu0 0
      %1755 = vperm.xlu0 %1754, %v1126
      %v1756 = vpop.permute.xlu0 %1755
      %1759 = vset.pattern.permute.xlu0 0
      %1760 = vperm.xlu0 %1759, %v1127
      %v1761 = vpop.permute.xlu0 %1760
      %1764 = vset.pattern.permute.xlu0 0
      %1765 = vperm.xlu0 %1764, %v1128
      %v1766 = vpop.permute.xlu0 %1765
      %1769 = vset.pattern.permute.xlu0 0
      %1770 = vperm.xlu0 %1769, %v1129
      %v1771 = vpop.permute.xlu0 %1770
      %1774 = vset.pattern.permute.xlu0 0
      %1775 = vperm.xlu0 %1774, %v1130
      %v1776 = vpop.permute.xlu0 %1775
      %1779 = vset.pattern.permute.xlu0 0
      %1780 = vperm.xlu0 %1779, %v1131
      %v1781 = vpop.permute.xlu0 %1780
      %1784 = vset.pattern.permute.xlu0 0
      %1785 = vperm.xlu0 %1784, %v1132
      %v1786 = vpop.permute.xlu0 %1785
      %1789 = vset.pattern.permute.xlu0 0
      %1790 = vperm.xlu0 %1789, %v1133
      %v1791 = vpop.permute.xlu0 %1790
      %v1793 = vsub.f32 %v322, %v1716
      %v1794 = vsub.f32 %v323, %v1721
      %v1795 = vsub.f32 %v324, %v1726
      %v1796 = vsub.f32 %v325, %v1731
      %v1797 = vsub.f32 %v326, %v1736
      %v1798 = vsub.f32 %v327, %v1741
      %v1799 = vsub.f32 %v328, %v1746
      %v1800 = vsub.f32 %v329, %v1751
      %v1801 = vsub.f32 %v330, %v1756
      %v1802 = vsub.f32 %v331, %v1761
      %v1803 = vsub.f32 %v332, %v1766
      %v1804 = vsub.f32 %v333, %v1771
      %v1805 = vsub.f32 %v334, %v1776
      %v1806 = vsub.f32 %v335, %v1781
      %v1807 = vsub.f32 %v336, %v1786
      %v1808 = vsub.f32 %v337, %v1791
      %v1809 = vlaneseq
      %v1810 = vshrl.u32 %v1809, 7
      %v1811 = vsub.s32 4, %v1810
      %v1812 = vrot.slane %v1050, %v1811
      %v1813 = vmul.f32 %v1793, %v1812
      %v1814 = vmul.f32 %v1794, %v1812
      %v1815 = vmul.f32 %v1795, %v1812
      %v1816 = vmul.f32 %v1796, %v1812
      %v1817 = vmul.f32 %v1797, %v1812
      %v1818 = vmul.f32 %v1798, %v1812
      %v1819 = vmul.f32 %v1799, %v1812
      %v1820 = vmul.f32 %v1800, %v1812
      %v1821 = vmul.f32 %v1801, %v1812
      %v1822 = vmul.f32 %v1802, %v1812
      %v1823 = vmul.f32 %v1803, %v1812
      %v1824 = vmul.f32 %v1804, %v1812
      %v1825 = vmul.f32 %v1805, %v1812
      %v1826 = vmul.f32 %v1806, %v1812
      %v1827 = vmul.f32 %v1807, %v1812
      %v1828 = vmul.f32 %v1808, %v1812
      %s1829 = scalar_lea.vmem %s241, 512
      %1830 = vst.msk [vmem:[%s1829] sm:$0xff] %vm282, %v1813
      %1831 = vst.msk [vmem:[%s1829 + $0x8] sm:$0xff] %vm282, %v1814
      %1832 = vst.msk [vmem:[%s1829 + $0x10] sm:$0xff] %vm282, %v1815
      %1833 = vst.msk [vmem:[%s1829 + $0x18] sm:$0xff] %vm282, %v1816
      %1834 = vst.msk [vmem:[%s1829 + $0x20] sm:$0xff] %vm282, %v1817
      %1835 = vst.msk [vmem:[%s1829 + $0x28] sm:$0xff] %vm282, %v1818
      %1836 = vst.msk [vmem:[%s1829 + $0x30] sm:$0xff] %vm282, %v1819
      %1837 = vst.msk [vmem:[%s1829 + $0x38] sm:$0xff] %vm282, %v1820
      %1838 = vst.msk [vmem:[%s1829 + $0x40] sm:$0xff] %vm282, %v1821
      %1839 = vst.msk [vmem:[%s1829 + $0x48] sm:$0xff] %vm282, %v1822
      %1840 = vst.msk [vmem:[%s1829 + $0x50] sm:$0xff] %vm282, %v1823
      %1841 = vst.msk [vmem:[%s1829 + $0x58] sm:$0xff] %vm282, %v1824
      %1842 = vst.msk [vmem:[%s1829 + $0x60] sm:$0xff] %vm282, %v1825
      %1843 = vst.msk [vmem:[%s1829 + $0x68] sm:$0xff] %vm282, %v1826
      %1844 = vst.msk [vmem:[%s1829 + $0x70] sm:$0xff] %vm282, %v1827
      %1845 = vst.msk [vmem:[%s1829 + $0x78] sm:$0xff] %vm282, %v1828
      %1847 = vset.pattern.permute.xlu0 0
      %1848 = vperm.xlu0 %1847, %v1134
      %v1849 = vpop.permute.xlu0 %1848
      %1852 = vset.pattern.permute.xlu0 0
      %1853 = vperm.xlu0 %1852, %v1135
      %v1854 = vpop.permute.xlu0 %1853
      %1857 = vset.pattern.permute.xlu0 0
      %1858 = vperm.xlu0 %1857, %v1136
      %v1859 = vpop.permute.xlu0 %1858
      %1862 = vset.pattern.permute.xlu0 0
      %1863 = vperm.xlu0 %1862, %v1137
      %v1864 = vpop.permute.xlu0 %1863
      %1867 = vset.pattern.permute.xlu0 0
      %1868 = vperm.xlu0 %1867, %v1138
      %v1869 = vpop.permute.xlu0 %1868
      %1872 = vset.pattern.permute.xlu0 0
      %1873 = vperm.xlu0 %1872, %v1139
      %v1874 = vpop.permute.xlu0 %1873
      %1877 = vset.pattern.permute.xlu0 0
      %1878 = vperm.xlu0 %1877, %v1140
      %v1879 = vpop.permute.xlu0 %1878
      %1882 = vset.pattern.permute.xlu0 0
      %1883 = vperm.xlu0 %1882, %v1141
      %v1884 = vpop.permute.xlu0 %1883
      %1887 = vset.pattern.permute.xlu0 0
      %1888 = vperm.xlu0 %1887, %v1142
      %v1889 = vpop.permute.xlu0 %1888
      %1892 = vset.pattern.permute.xlu0 0
      %1893 = vperm.xlu0 %1892, %v1143
      %v1894 = vpop.permute.xlu0 %1893
      %1897 = vset.pattern.permute.xlu0 0
      %1898 = vperm.xlu0 %1897, %v1144
      %v1899 = vpop.permute.xlu0 %1898
      %1902 = vset.pattern.permute.xlu0 0
      %1903 = vperm.xlu0 %1902, %v1145
      %v1904 = vpop.permute.xlu0 %1903
      %1907 = vset.pattern.permute.xlu0 0
      %1908 = vperm.xlu0 %1907, %v1146
      %v1909 = vpop.permute.xlu0 %1908
      %1912 = vset.pattern.permute.xlu0 0
      %1913 = vperm.xlu0 %1912, %v1147
      %v1914 = vpop.permute.xlu0 %1913
      %1917 = vset.pattern.permute.xlu0 0
      %1918 = vperm.xlu0 %1917, %v1148
      %v1919 = vpop.permute.xlu0 %1918
      %1922 = vset.pattern.permute.xlu0 0
      %1923 = vperm.xlu0 %1922, %v1149
      %v1924 = vpop.permute.xlu0 %1923
      %v1926 = vsub.f32 %v322, %v1849
      %v1927 = vsub.f32 %v323, %v1854
      %v1928 = vsub.f32 %v324, %v1859
      %v1929 = vsub.f32 %v325, %v1864
      %v1930 = vsub.f32 %v326, %v1869
      %v1931 = vsub.f32 %v327, %v1874
      %v1932 = vsub.f32 %v328, %v1879
      %v1933 = vsub.f32 %v329, %v1884
      %v1934 = vsub.f32 %v330, %v1889
      %v1935 = vsub.f32 %v331, %v1894
      %v1936 = vsub.f32 %v332, %v1899
      %v1937 = vsub.f32 %v333, %v1904
      %v1938 = vsub.f32 %v334, %v1909
      %v1939 = vsub.f32 %v335, %v1914
      %v1940 = vsub.f32 %v336, %v1919
      %v1941 = vsub.f32 %v337, %v1924
      %v1942 = vlaneseq
      %v1943 = vshrl.u32 %v1942, 7
      %v1944 = vsub.s32 5, %v1943
      %v1945 = vrot.slane %v1050, %v1944
      %v1946 = vmul.f32 %v1926, %v1945
      %v1947 = vmul.f32 %v1927, %v1945
      %v1948 = vmul.f32 %v1928, %v1945
      %v1949 = vmul.f32 %v1929, %v1945
      %v1950 = vmul.f32 %v1930, %v1945
      %v1951 = vmul.f32 %v1931, %v1945
      %v1952 = vmul.f32 %v1932, %v1945
      %v1953 = vmul.f32 %v1933, %v1945
      %v1954 = vmul.f32 %v1934, %v1945
      %v1955 = vmul.f32 %v1935, %v1945
      %v1956 = vmul.f32 %v1936, %v1945
      %v1957 = vmul.f32 %v1937, %v1945
      %v1958 = vmul.f32 %v1938, %v1945
      %v1959 = vmul.f32 %v1939, %v1945
      %v1960 = vmul.f32 %v1940, %v1945
      %v1961 = vmul.f32 %v1941, %v1945
      %s1962 = scalar_lea.vmem %s241, 640
      %1963 = vst.msk [vmem:[%s1962] sm:$0xff] %vm282, %v1946
      %1964 = vst.msk [vmem:[%s1962 + $0x8] sm:$0xff] %vm282, %v1947
      %1965 = vst.msk [vmem:[%s1962 + $0x10] sm:$0xff] %vm282, %v1948
      %1966 = vst.msk [vmem:[%s1962 + $0x18] sm:$0xff] %vm282, %v1949
      %1967 = vst.msk [vmem:[%s1962 + $0x20] sm:$0xff] %vm282, %v1950
      %1968 = vst.msk [vmem:[%s1962 + $0x28] sm:$0xff] %vm282, %v1951
      %1969 = vst.msk [vmem:[%s1962 + $0x30] sm:$0xff] %vm282, %v1952
      %1970 = vst.msk [vmem:[%s1962 + $0x38] sm:$0xff] %vm282, %v1953
      %1971 = vst.msk [vmem:[%s1962 + $0x40] sm:$0xff] %vm282, %v1954
      %1972 = vst.msk [vmem:[%s1962 + $0x48] sm:$0xff] %vm282, %v1955
      %1973 = vst.msk [vmem:[%s1962 + $0x50] sm:$0xff] %vm282, %v1956
      %1974 = vst.msk [vmem:[%s1962 + $0x58] sm:$0xff] %vm282, %v1957
      %1975 = vst.msk [vmem:[%s1962 + $0x60] sm:$0xff] %vm282, %v1958
      %1976 = vst.msk [vmem:[%s1962 + $0x68] sm:$0xff] %vm282, %v1959
      %1977 = vst.msk [vmem:[%s1962 + $0x70] sm:$0xff] %vm282, %v1960
      %1978 = vst.msk [vmem:[%s1962 + $0x78] sm:$0xff] %vm282, %v1961
      %1980 = vset.pattern.permute.xlu0 0
      %1981 = vperm.xlu0 %1980, %v1150
      %v1982 = vpop.permute.xlu0 %1981
      %1985 = vset.pattern.permute.xlu0 0
      %1986 = vperm.xlu0 %1985, %v1151
      %v1987 = vpop.permute.xlu0 %1986
      %1990 = vset.pattern.permute.xlu0 0
      %1991 = vperm.xlu0 %1990, %v1152
      %v1992 = vpop.permute.xlu0 %1991
      %1995 = vset.pattern.permute.xlu0 0
      %1996 = vperm.xlu0 %1995, %v1153
      %v1997 = vpop.permute.xlu0 %1996
      %2000 = vset.pattern.permute.xlu0 0
      %2001 = vperm.xlu0 %2000, %v1154
      %v2002 = vpop.permute.xlu0 %2001
      %2005 = vset.pattern.permute.xlu0 0
      %2006 = vperm.xlu0 %2005, %v1155
      %v2007 = vpop.permute.xlu0 %2006
      %2010 = vset.pattern.permute.xlu0 0
      %2011 = vperm.xlu0 %2010, %v1156
      %v2012 = vpop.permute.xlu0 %2011
      %2015 = vset.pattern.permute.xlu0 0
      %2016 = vperm.xlu0 %2015, %v1157
      %v2017 = vpop.permute.xlu0 %2016
      %2020 = vset.pattern.permute.xlu0 0
      %2021 = vperm.xlu0 %2020, %v1158
      %v2022 = vpop.permute.xlu0 %2021
      %2025 = vset.pattern.permute.xlu0 0
      %2026 = vperm.xlu0 %2025, %v1159
      %v2027 = vpop.permute.xlu0 %2026
      %2030 = vset.pattern.permute.xlu0 0
      %2031 = vperm.xlu0 %2030, %v1160
      %v2032 = vpop.permute.xlu0 %2031
      %2035 = vset.pattern.permute.xlu0 0
      %2036 = vperm.xlu0 %2035, %v1161
      %v2037 = vpop.permute.xlu0 %2036
      %2040 = vset.pattern.permute.xlu0 0
      %2041 = vperm.xlu0 %2040, %v1162
      %v2042 = vpop.permute.xlu0 %2041
      %2045 = vset.pattern.permute.xlu0 0
      %2046 = vperm.xlu0 %2045, %v1163
      %v2047 = vpop.permute.xlu0 %2046
      %2050 = vset.pattern.permute.xlu0 0
      %2051 = vperm.xlu0 %2050, %v1164
      %v2052 = vpop.permute.xlu0 %2051
      %2055 = vset.pattern.permute.xlu0 0
      %2056 = vperm.xlu0 %2055, %v1165
      %v2057 = vpop.permute.xlu0 %2056
      %v2059 = vsub.f32 %v322, %v1982
      %v2060 = vsub.f32 %v323, %v1987
      %v2061 = vsub.f32 %v324, %v1992
      %v2062 = vsub.f32 %v325, %v1997
      %v2063 = vsub.f32 %v326, %v2002
      %v2064 = vsub.f32 %v327, %v2007
      %v2065 = vsub.f32 %v328, %v2012
      %v2066 = vsub.f32 %v329, %v2017
      %v2067 = vsub.f32 %v330, %v2022
      %v2068 = vsub.f32 %v331, %v2027
      %v2069 = vsub.f32 %v332, %v2032
      %v2070 = vsub.f32 %v333, %v2037
      %v2071 = vsub.f32 %v334, %v2042
      %v2072 = vsub.f32 %v335, %v2047
      %v2073 = vsub.f32 %v336, %v2052
      %v2074 = vsub.f32 %v337, %v2057
      %v2075 = vlaneseq
      %v2076 = vshrl.u32 %v2075, 7
      %v2077 = vsub.s32 6, %v2076
      %v2078 = vrot.slane %v1050, %v2077
      %v2079 = vmul.f32 %v2059, %v2078
      %v2080 = vmul.f32 %v2060, %v2078
      %v2081 = vmul.f32 %v2061, %v2078
      %v2082 = vmul.f32 %v2062, %v2078
      %v2083 = vmul.f32 %v2063, %v2078
      %v2084 = vmul.f32 %v2064, %v2078
      %v2085 = vmul.f32 %v2065, %v2078
      %v2086 = vmul.f32 %v2066, %v2078
      %v2087 = vmul.f32 %v2067, %v2078
      %v2088 = vmul.f32 %v2068, %v2078
      %v2089 = vmul.f32 %v2069, %v2078
      %v2090 = vmul.f32 %v2070, %v2078
      %v2091 = vmul.f32 %v2071, %v2078
      %v2092 = vmul.f32 %v2072, %v2078
      %v2093 = vmul.f32 %v2073, %v2078
      %v2094 = vmul.f32 %v2074, %v2078
      %s2095 = scalar_lea.vmem %s241, 768
      %2096 = vst.msk [vmem:[%s2095] sm:$0xff] %vm282, %v2079
      %2097 = vst.msk [vmem:[%s2095 + $0x8] sm:$0xff] %vm282, %v2080
      %2098 = vst.msk [vmem:[%s2095 + $0x10] sm:$0xff] %vm282, %v2081
      %2099 = vst.msk [vmem:[%s2095 + $0x18] sm:$0xff] %vm282, %v2082
      %2100 = vst.msk [vmem:[%s2095 + $0x20] sm:$0xff] %vm282, %v2083
      %2101 = vst.msk [vmem:[%s2095 + $0x28] sm:$0xff] %vm282, %v2084
      %2102 = vst.msk [vmem:[%s2095 + $0x30] sm:$0xff] %vm282, %v2085
      %2103 = vst.msk [vmem:[%s2095 + $0x38] sm:$0xff] %vm282, %v2086
      %2104 = vst.msk [vmem:[%s2095 + $0x40] sm:$0xff] %vm282, %v2087
      %2105 = vst.msk [vmem:[%s2095 + $0x48] sm:$0xff] %vm282, %v2088
      %2106 = vst.msk [vmem:[%s2095 + $0x50] sm:$0xff] %vm282, %v2089
      %2107 = vst.msk [vmem:[%s2095 + $0x58] sm:$0xff] %vm282, %v2090
      %2108 = vst.msk [vmem:[%s2095 + $0x60] sm:$0xff] %vm282, %v2091
      %2109 = vst.msk [vmem:[%s2095 + $0x68] sm:$0xff] %vm282, %v2092
      %2110 = vst.msk [vmem:[%s2095 + $0x70] sm:$0xff] %vm282, %v2093
      %2111 = vst.msk [vmem:[%s2095 + $0x78] sm:$0xff] %vm282, %v2094
      %2113 = vset.pattern.permute.xlu0 0
      %2114 = vperm.xlu0 %2113, %v1166
      %v2115 = vpop.permute.xlu0 %2114
      %2118 = vset.pattern.permute.xlu0 0
      %2119 = vperm.xlu0 %2118, %v1167
      %v2120 = vpop.permute.xlu0 %2119
      %2123 = vset.pattern.permute.xlu0 0
      %2124 = vperm.xlu0 %2123, %v1168
      %v2125 = vpop.permute.xlu0 %2124
      %2128 = vset.pattern.permute.xlu0 0
      %2129 = vperm.xlu0 %2128, %v1169
      %v2130 = vpop.permute.xlu0 %2129
      %2133 = vset.pattern.permute.xlu0 0
      %2134 = vperm.xlu0 %2133, %v1170
      %v2135 = vpop.permute.xlu0 %2134
      %2138 = vset.pattern.permute.xlu0 0
      %2139 = vperm.xlu0 %2138, %v1171
      %v2140 = vpop.permute.xlu0 %2139
      %2143 = vset.pattern.permute.xlu0 0
      %2144 = vperm.xlu0 %2143, %v1172
      %v2145 = vpop.permute.xlu0 %2144
      %2148 = vset.pattern.permute.xlu0 0
      %2149 = vperm.xlu0 %2148, %v1173
      %v2150 = vpop.permute.xlu0 %2149
      %2153 = vset.pattern.permute.xlu0 0
      %2154 = vperm.xlu0 %2153, %v1174
      %v2155 = vpop.permute.xlu0 %2154
      %2158 = vset.pattern.permute.xlu0 0
      %2159 = vperm.xlu0 %2158, %v1175
      %v2160 = vpop.permute.xlu0 %2159
      %2163 = vset.pattern.permute.xlu0 0
      %2164 = vperm.xlu0 %2163, %v1176
      %v2165 = vpop.permute.xlu0 %2164
      %2168 = vset.pattern.permute.xlu0 0
      %2169 = vperm.xlu0 %2168, %v1177
      %v2170 = vpop.permute.xlu0 %2169
      %2173 = vset.pattern.permute.xlu0 0
      %2174 = vperm.xlu0 %2173, %v1178
      %v2175 = vpop.permute.xlu0 %2174
      %2178 = vset.pattern.permute.xlu0 0
      %2179 = vperm.xlu0 %2178, %v1179
      %v2180 = vpop.permute.xlu0 %2179
      %2183 = vset.pattern.permute.xlu0 0
      %2184 = vperm.xlu0 %2183, %v1180
      %v2185 = vpop.permute.xlu0 %2184
      %2188 = vset.pattern.permute.xlu0 0
      %2189 = vperm.xlu0 %2188, %v1181
      %v2190 = vpop.permute.xlu0 %2189
      %v2192 = vsub.f32 %v322, %v2115
      %v2193 = vsub.f32 %v323, %v2120
      %v2194 = vsub.f32 %v324, %v2125
      %v2195 = vsub.f32 %v325, %v2130
      %v2196 = vsub.f32 %v326, %v2135
      %v2197 = vsub.f32 %v327, %v2140
      %v2198 = vsub.f32 %v328, %v2145
      %v2199 = vsub.f32 %v329, %v2150
      %v2200 = vsub.f32 %v330, %v2155
      %v2201 = vsub.f32 %v331, %v2160
      %v2202 = vsub.f32 %v332, %v2165
      %v2203 = vsub.f32 %v333, %v2170
      %v2204 = vsub.f32 %v334, %v2175
      %v2205 = vsub.f32 %v335, %v2180
      %v2206 = vsub.f32 %v336, %v2185
      %v2207 = vsub.f32 %v337, %v2190
      %v2208 = vlaneseq
      %v2209 = vshrl.u32 %v2208, 7
      %v2210 = vsub.s32 7, %v2209
      %v2211 = vrot.slane %v1050, %v2210
      %v2212 = vmul.f32 %v2192, %v2211
      %v2213 = vmul.f32 %v2193, %v2211
      %v2214 = vmul.f32 %v2194, %v2211
      %v2215 = vmul.f32 %v2195, %v2211
      %v2216 = vmul.f32 %v2196, %v2211
      %v2217 = vmul.f32 %v2197, %v2211
      %v2218 = vmul.f32 %v2198, %v2211
      %v2219 = vmul.f32 %v2199, %v2211
      %v2220 = vmul.f32 %v2200, %v2211
      %v2221 = vmul.f32 %v2201, %v2211
      %v2222 = vmul.f32 %v2202, %v2211
      %v2223 = vmul.f32 %v2203, %v2211
      %v2224 = vmul.f32 %v2204, %v2211
      %v2225 = vmul.f32 %v2205, %v2211
      %v2226 = vmul.f32 %v2206, %v2211
      %v2227 = vmul.f32 %v2207, %v2211
      %s2228 = scalar_lea.vmem %s241, 896
      %2229 = vst.msk [vmem:[%s2228] sm:$0xff] %vm282, %v2212
      %2230 = vst.msk [vmem:[%s2228 + $0x8] sm:$0xff] %vm282, %v2213
      %2231 = vst.msk [vmem:[%s2228 + $0x10] sm:$0xff] %vm282, %v2214
      %2232 = vst.msk [vmem:[%s2228 + $0x18] sm:$0xff] %vm282, %v2215
      %2233 = vst.msk [vmem:[%s2228 + $0x20] sm:$0xff] %vm282, %v2216
      %2234 = vst.msk [vmem:[%s2228 + $0x28] sm:$0xff] %vm282, %v2217
      %2235 = vst.msk [vmem:[%s2228 + $0x30] sm:$0xff] %vm282, %v2218
      %2236 = vst.msk [vmem:[%s2228 + $0x38] sm:$0xff] %vm282, %v2219
      %2237 = vst.msk [vmem:[%s2228 + $0x40] sm:$0xff] %vm282, %v2220
      %2238 = vst.msk [vmem:[%s2228 + $0x48] sm:$0xff] %vm282, %v2221
      %2239 = vst.msk [vmem:[%s2228 + $0x50] sm:$0xff] %vm282, %v2222
      %2240 = vst.msk [vmem:[%s2228 + $0x58] sm:$0xff] %vm282, %v2223
      %2241 = vst.msk [vmem:[%s2228 + $0x60] sm:$0xff] %vm282, %v2224
      %2242 = vst.msk [vmem:[%s2228 + $0x68] sm:$0xff] %vm282, %v2225
      %2243 = vst.msk [vmem:[%s2228 + $0x70] sm:$0xff] %vm282, %v2226
      %2244 = vst.msk [vmem:[%s2228 + $0x78] sm:$0xff] %vm282, %v2227
      %p2245 = scmp.lt.s32.totalorder %s20, 1
      %s2246 = scalar_select %p2245, %s20, 1
      %p2247 = scmp.lt.s32.totalorder %s21, 0
      %s2248 = scalar_select %p2247, %s21, 0
      %s2249 = smul.addr %s2246, 128
      %s2250 = sadd.s32 %s2248, %s2249
      %s2251 = smul.addr %s2250, 8
      %s2252 = scalar_lea.vmem %s3, %s2251
      %p2253 = scmp.lt.s32.totalorder %s20, 1
      %s2254 = scalar_select %p2253, %s20, 1
      %p2255 = scmp.lt.s32.totalorder %s21, 0
      %s2256 = scalar_select %p2255, %s21, 0
      %s2257 = smul.addr %s2254, 2
      %s2258 = sadd.s32 %s2256, %s2257
      %s2259 = smul.addr %s2258, 8
      %s2260 = scalar_lea.vmem %s4, %s2259
      // Predicated region
      $region33: #{tpu_custom_call.1} parent=31 // pred_check
        %p2261 = pneg %p118
      $region34: #{tpu_custom_call.1} parent=31 // pred_check_branch
        %2263 = sbr.rel (%p2261) target = $region36
      $region35: #{tpu_custom_call.1} parent=31 // pred_region
        _
      $region36: #{tpu_custom_call.1} parent=31 // pred_fallthru
        _
      // Predicated region
      $region37: #{tpu_custom_call.1} parent=31 // pred_check
        %p2264 = pneg %p146
      $region38: #{tpu_custom_call.1} parent=31 // pred_check_branch
        %2266 = sbr.rel (%p2264) target = $region40
      $region39: #{tpu_custom_call.1} parent=31 // pred_region
        _
      $region40: #{tpu_custom_call.1} parent=31 // pred_fallthru
        _
    $region32: #{tpu_custom_call.1} parent=5 // pred_fallthru
      _
    %p2267 = scmp.le.s32.totalorder 2, %s11
    // Predicated region
    $region41: #{tpu_custom_call.1} parent=5 // pred_check
      %p2268 = pneg %p2267
    $region42: #{tpu_custom_call.1} parent=5 // pred_check_branch
      %2270 = sbr.rel (%p2268) target = $region44
    $region43: #{tpu_custom_call.1} parent=5 // pred_region
      %s2271 = ssub.s32 %s11, 2
      // Predicated region
      $region45: #{tpu_custom_call.1} parent=43 // pred_check
        %p2272 = pneg %p124
      $region46: #{tpu_custom_call.1} parent=43 // pred_check_branch
        %2274 = sbr.rel (%p2272) target = $region48
      $region47: #{tpu_custom_call.1} parent=43 // pred_region
        %p2275 = scmp.lt.s32.totalorder %s22, 1
        %s2276 = scalar_select %p2275, %s22, 1
        %p2277 = scmp.lt.s32.totalorder %s23, 0
        %s2278 = scalar_select %p2277, %s23, 0
        %s2279 = smul.addr %s2276, 128
        %s2280 = sadd.s32 %s2278, %s2279
        %s2281 = smul.addr %s2280, 8
        %s2282 = scalar_lea.vmem %s3, %s2281
      $region48: #{tpu_custom_call.1} parent=43 // pred_fallthru
        _
      // Predicated region
      $region49: #{tpu_custom_call.1} parent=43 // pred_check
        %p2283 = pneg %p152
      $region50: #{tpu_custom_call.1} parent=43 // pred_check_branch
        %2285 = sbr.rel (%p2283) target = $region52
      $region51: #{tpu_custom_call.1} parent=43 // pred_region
        %p2286 = scmp.lt.s32.totalorder %s22, 1
        %s2287 = scalar_select %p2286, %s22, 1
        %p2288 = scmp.lt.s32.totalorder %s23, 0
        %s2289 = scalar_select %p2288, %s23, 0
        %s2290 = smul.addr %s2287, 2
        %s2291 = sadd.s32 %s2289, %s2290
        %s2292 = smul.addr %s2291, 8
        %s2293 = scalar_lea.vmem %s4, %s2292
      $region52: #{tpu_custom_call.1} parent=43 // pred_fallthru
        _
    $region44: #{tpu_custom_call.1} parent=5 // pred_fallthru
      _
  $region6: #{tpu_custom_call.1} parent=0 // loop_footer
    %s15 = sadd.s32 1, %s11
  $region7: #{tpu_custom_call.1} parent=0 // loop_footer_branch
    %10 = sbr.rel target = $region3
  $region8: #{tpu_custom_call.1} parent=0 // loop_exit
    _

</llo_original>
